<compile_context>
chip_gen: v7x
topology: tpu7x:2x2x1
jax: 0.10.0
libtpu: 0.0.40
codegen_flags: <defaults>
</compile_context>

<pallas_src>
import jax
import jax.numpy as jnp
from jax.experimental import pallas as pl
from jax.experimental.pallas import tpu as pltpu

IN_FEAT = 13
HIDDEN = 96
HIDDEN_PAD = 128          # hidden / input / logit dims all padded to 128 lanes
OUT_CLASSES = 2
NUM_LAYERS = 6
BATCH_TILE = 128


def mlp_kernel(x_ref, w_ref, b_ref, o_ref):
    f32 = jnp.float32
    bf16 = jnp.bfloat16

    h = x_ref[...]                      # (TB, 128) f32, features in cols 0..12
    b_all = b_ref[...]                  # (6, 128)  f32

    # Layers 1..5: (TB,128)@(128,128) + bias + ReLU.  Padded weight rows/cols
    # are zero and padded biases are zero, so padded lanes stay exactly 0.
    for i in range(NUM_LAYERS - 1):
        z = jnp.dot(h.astype(bf16), w_ref[i], preferred_element_type=f32)
        h = jnp.maximum(z + b_all[i], 0.0)

    # Layer 6: (TB,128)@(128,128); only the first 2 output columns are real.
    z = jnp.dot(h.astype(bf16), w_ref[NUM_LAYERS - 1], preferred_element_type=f32)
    logits_full = z + b_all[NUM_LAYERS - 1]

    # Mask padded logit columns to a huge negative so logsumexp only sees the
    # 2 real classes (exp underflows to exactly 0 for the padded lanes).
    col = jax.lax.broadcasted_iota(jnp.int32, logits_full.shape, 1)
    logits = jnp.where(col < OUT_CLASSES, logits_full, jnp.float32(-1e30))

    m = jnp.max(logits, axis=-1, keepdims=True)
    shifted = logits - m
    lse = jnp.log(jnp.sum(jnp.exp(shifted), axis=-1, keepdims=True))
    o_ref[...] = shifted - lse          # lane-dense (TB,128) store


def pack_params(params):
    """params: 6 pairs (W:(in,out) f32, b:(out,) f32) -> ((6,128,128) bf16, (6,128) f32)."""
    ws, bs = [], []
    for (w, b) in params:
        r, c = w.shape
        ws.append(jnp.pad(w, ((0, HIDDEN_PAD - r), (0, HIDDEN_PAD - c))))
        bs.append(jnp.pad(b.reshape(-1), (0, HIDDEN_PAD - b.shape[0])))
    w_all = jnp.stack(ws).astype(jnp.bfloat16)       # (6, 128, 128)
    b_all = jnp.stack(bs).astype(jnp.float32)        # (6, 128)
    return w_all, b_all


def wine_net_forward(x, packed, *, tb=BATCH_TILE):
    """x: (B, 13) f32; packed: output of pack_params.  Returns (B, 2) log-probs."""
    w_all, b_all = packed
    B = x.shape[0]
    b_pad = ((B + tb - 1) // tb) * tb

    # Pad batch to a multiple of the batch tile and features 13 -> 128.
    x_p = jnp.zeros((b_pad, HIDDEN_PAD), jnp.float32)
    x_p = x_p.at[:B, :IN_FEAT].set(x.astype(jnp.float32))

    cost = pl.CostEstimate(
        flops=2 * b_pad * HIDDEN_PAD * HIDDEN_PAD * NUM_LAYERS,
        transcendentals=b_pad * (HIDDEN_PAD + 1),
        bytes_accessed=(2 * b_pad * HIDDEN_PAD * 4            # x in + out
                        + NUM_LAYERS * HIDDEN_PAD * HIDDEN_PAD * 2   # bf16 weights
                        + NUM_LAYERS * HIDDEN_PAD * 4),              # biases
    )

    out = pl.pallas_call(
        mlp_kernel,
        out_shape=jax.ShapeDtypeStruct((b_pad, HIDDEN_PAD), jnp.float32),
        grid_spec=pltpu.PrefetchScalarGridSpec(
            num_scalar_prefetch=0,
            grid=(b_pad // tb,),
            in_specs=[
                pl.BlockSpec((tb, HIDDEN_PAD), lambda i: (i, 0)),
                pl.BlockSpec((NUM_LAYERS, HIDDEN_PAD, HIDDEN_PAD),
                             lambda i: (0, 0, 0)),       # weights resident
                pl.BlockSpec((NUM_LAYERS, HIDDEN_PAD), lambda i: (0, 0)),
            ],
            out_specs=pl.BlockSpec((tb, HIDDEN_PAD), lambda i: (i, 0)),
        ),
        compiler_params=pltpu.CompilerParams(
            dimension_semantics=("parallel",)),          # v7x: shard batch across TCs
        cost_estimate=cost,
    )(x_p, w_all, b_all)

    return out[:B, :OUT_CLASSES]


def init_params(key):
    """Deterministic init mimicking nn.Linear default (uniform +/- 1/sqrt(fan_in)).
    Weights stored as (in, out) so h = x @ W + b  ==  PyTorch x @ W.T + b."""
    dims = [(13, 96), (96, 96), (96, 96), (96, 96), (96, 96), (96, 2)]
    params = []
    for (fan_in, fan_out) in dims:
        key, kw, kb = jax.random.split(key, 3)
        bound = 1.0 / (fan_in ** 0.5)
        w = jax.random.uniform(kw, (fan_in, fan_out), jnp.float32, -bound, bound)
        b = jax.random.uniform(kb, (fan_out,), jnp.float32, -bound, bound)
        params.append((w, b))
    return params


def reference_forward_f32(x, params):
    """Pure-f32 reference for the PyTorch module semantics."""
    h = x
    for (w, b) in params[:-1]:
        h = jnp.maximum(h @ w + b.reshape(1, -1), 0.0)
    logits = h @ params[-1][0] + params[-1][1].reshape(1, -1)
    return jax.nn.log_softmax(logits, axis=-1)


def reference_forward_bf16(x, packed):
    """Reference performing the same bf16-MXU / f32-accum arithmetic as the kernel."""
    w_all, b_all = packed
    h = jnp.zeros((x.shape[0], HIDDEN_PAD), jnp.float32)
    h = h.at[:, :IN_FEAT].set(x.astype(jnp.float32))
    for i in range(NUM_LAYERS - 1):
        z = jnp.dot(h.astype(jnp.bfloat16), w_all[i], preferred_element_type=jnp.float32)
        h = jnp.maximum(z + b_all[i], 0.0)
    z = jnp.dot(h.astype(jnp.bfloat16), w_all[NUM_LAYERS - 1],
                preferred_element_type=jnp.float32)
    logits = (z + b_all[NUM_LAYERS - 1])[:, :OUT_CLASSES]
    return jax.nn.log_softmax(logits, axis=-1)


if __name__ == "__main__":
    key = jax.random.PRNGKey(0)
    key, kx = jax.random.split(key)

    # Larger batch per call (perf feedback): B=200 also exercises the
    # pad-to-batch-tile path (200 -> 256, grid of 2 parallel tiles).
    B = 200
    x = jax.random.normal(kx, (B, IN_FEAT), dtype=jnp.float32)
    params = init_params(key)
    packed = pack_params(params)

    out = wine_net_forward(x, packed)
    out = jax.block_until_ready(out)
    assert out.shape == (B, OUT_CLASSES)
    assert bool(jnp.all(jnp.isfinite(out)))

    # Tight check vs a reference doing identical bf16-MXU / f32-accum arithmetic.
    ref_bf16 = reference_forward_bf16(x, packed)
    assert jnp.allclose(out, ref_bf16, atol=2e-3, rtol=2e-3)

    # Loose sanity check vs the pure-f32 PyTorch-semantics reference
    # (bf16 weights introduce ~1e-2-level absolute differences).
    ref_f32 = reference_forward_f32(x, params)
    assert jnp.allclose(out, ref_f32, atol=1e-1)

    print("KERNEL_OK")
</pallas_src>

<mosaic_0001>
module attributes {stable_mosaic.version = 11 : i64} {
  func.func @mlp_kernel(%arg0: i32, %arg1: memref<128x128xf32, #tpu.memory_space<vmem>>, %arg2: memref<6x128x128xbf16, #tpu.memory_space<vmem>>, %arg3: memref<6x128xf32, #tpu.memory_space<vmem>>, %arg4: memref<128x128xf32, #tpu.memory_space<vmem>>) attributes {dimension_semantics = [#tpu.dimension_semantics<parallel>], iteration_bounds = array<i64: 2>, scalar_prefetch = 0 : i64, scratch_operands = 0 : i64, tpu.core_type = #tpu.core_type<tc>, window_params = [{transform_indices = @transform_0, window_bounds = array<i64: 128, 128>}, {pipeline_mode = #tpu.pipeline_mode<synchronous>, transform_indices = @transform_1, window_bounds = array<i64: 6, 128, 128>}, {pipeline_mode = #tpu.pipeline_mode<synchronous>, transform_indices = @transform_2, window_bounds = array<i64: 6, 128>}, {transform_indices = @transform_3, window_bounds = array<i64: 128, 128>}]} {
    %c0 = arith.constant 0 : index
    %c0_0 = arith.constant 0 : index
    %0 = vector.load %arg1[%c0, %c0_0] : memref<128x128xf32, #tpu.memory_space<vmem>>, vector<128x128xf32>
    %c0_1 = arith.constant 0 : index
    %c0_2 = arith.constant 0 : index
    %1 = vector.load %arg3[%c0_1, %c0_2] : memref<6x128xf32, #tpu.memory_space<vmem>>, vector<6x128xf32>
    %2 = arith.truncf %0 : vector<128x128xf32> to vector<128x128xbf16>
    %c0_3 = arith.constant 0 : index
    %c0_4 = arith.constant 0 : index
    %c0_5 = arith.constant 0 : index
    %3 = vector.load %arg2[%c0_3, %c0_4, %c0_5] : memref<6x128x128xbf16, #tpu.memory_space<vmem>>, vector<1x128x128xbf16>
    %4 = vector.shape_cast %3 : vector<1x128x128xbf16> to vector<128x128xbf16>
    %cst = arith.constant dense<0.000000e+00> : vector<128x128xf32>
    %5 = tpu.matmul %2, %4, %cst {dimension_numbers = #tpu.dot_dimension_numbers<[1], [0], [0], [1], [0, 0, 1, 1], [], []>} : vector<128x128xbf16>, vector<128x128xbf16>, vector<128x128xf32> -> vector<128x128xf32>
    %6 = vector.extract_strided_slice %1 {offsets = [0, 0], sizes = [1, 128], strides = [1, 1]} : vector<6x128xf32> to vector<1x128xf32>
    %7 = vector.shape_cast %6 : vector<1x128xf32> to vector<128xf32>
    %8 = vector.shape_cast %7 : vector<128xf32> to vector<1x128xf32>
    %9 = vector.broadcast %8 : vector<1x128xf32> to vector<128x128xf32>
    %10 = arith.addf %5, %9 : vector<128x128xf32>
    %cst_6 = arith.constant 0.000000e+00 : f32
    %11 = vector.broadcast %cst_6 : f32 to vector<128x128xf32>
    %12 = arith.maximumf %10, %11 : vector<128x128xf32>
    %13 = arith.truncf %12 : vector<128x128xf32> to vector<128x128xbf16>
    %c1 = arith.constant 1 : index
    %c0_7 = arith.constant 0 : index
    %c0_8 = arith.constant 0 : index
    %14 = vector.load %arg2[%c1, %c0_7, %c0_8] : memref<6x128x128xbf16, #tpu.memory_space<vmem>>, vector<1x128x128xbf16>
    %15 = vector.shape_cast %14 : vector<1x128x128xbf16> to vector<128x128xbf16>
    %cst_9 = arith.constant dense<0.000000e+00> : vector<128x128xf32>
    %16 = tpu.matmul %13, %15, %cst_9 {dimension_numbers = #tpu.dot_dimension_numbers<[1], [0], [0], [1], [0, 0, 1, 1], [], []>} : vector<128x128xbf16>, vector<128x128xbf16>, vector<128x128xf32> -> vector<128x128xf32>
    %17 = vector.extract_strided_slice %1 {offsets = [1, 0], sizes = [1, 128], strides = [1, 1]} : vector<6x128xf32> to vector<1x128xf32>
    %18 = vector.shape_cast %17 : vector<1x128xf32> to vector<128xf32>
    %19 = vector.shape_cast %18 : vector<128xf32> to vector<1x128xf32>
    %20 = vector.broadcast %19 : vector<1x128xf32> to vector<128x128xf32>
    %21 = arith.addf %16, %20 : vector<128x128xf32>
    %cst_10 = arith.constant 0.000000e+00 : f32
    %22 = vector.broadcast %cst_10 : f32 to vector<128x128xf32>
    %23 = arith.maximumf %21, %22 : vector<128x128xf32>
    %24 = arith.truncf %23 : vector<128x128xf32> to vector<128x128xbf16>
    %c2 = arith.constant 2 : index
    %c0_11 = arith.constant 0 : index
    %c0_12 = arith.constant 0 : index
    %25 = vector.load %arg2[%c2, %c0_11, %c0_12] : memref<6x128x128xbf16, #tpu.memory_space<vmem>>, vector<1x128x128xbf16>
    %26 = vector.shape_cast %25 : vector<1x128x128xbf16> to vector<128x128xbf16>
    %cst_13 = arith.constant dense<0.000000e+00> : vector<128x128xf32>
    %27 = tpu.matmul %24, %26, %cst_13 {dimension_numbers = #tpu.dot_dimension_numbers<[1], [0], [0], [1], [0, 0, 1, 1], [], []>} : vector<128x128xbf16>, vector<128x128xbf16>, vector<128x128xf32> -> vector<128x128xf32>
    %28 = vector.extract_strided_slice %1 {offsets = [2, 0], sizes = [1, 128], strides = [1, 1]} : vector<6x128xf32> to vector<1x128xf32>
    %29 = vector.shape_cast %28 : vector<1x128xf32> to vector<128xf32>
    %30 = vector.shape_cast %29 : vector<128xf32> to vector<1x128xf32>
    %31 = vector.broadcast %30 : vector<1x128xf32> to vector<128x128xf32>
    %32 = arith.addf %27, %31 : vector<128x128xf32>
    %cst_14 = arith.constant 0.000000e+00 : f32
    %33 = vector.broadcast %cst_14 : f32 to vector<128x128xf32>
    %34 = arith.maximumf %32, %33 : vector<128x128xf32>
    %35 = arith.truncf %34 : vector<128x128xf32> to vector<128x128xbf16>
    %c3 = arith.constant 3 : index
    %c0_15 = arith.constant 0 : index
    %c0_16 = arith.constant 0 : index
    %36 = vector.load %arg2[%c3, %c0_15, %c0_16] : memref<6x128x128xbf16, #tpu.memory_space<vmem>>, vector<1x128x128xbf16>
    %37 = vector.shape_cast %36 : vector<1x128x128xbf16> to vector<128x128xbf16>
    %cst_17 = arith.constant dense<0.000000e+00> : vector<128x128xf32>
    %38 = tpu.matmul %35, %37, %cst_17 {dimension_numbers = #tpu.dot_dimension_numbers<[1], [0], [0], [1], [0, 0, 1, 1], [], []>} : vector<128x128xbf16>, vector<128x128xbf16>, vector<128x128xf32> -> vector<128x128xf32>
    %39 = vector.extract_strided_slice %1 {offsets = [3, 0], sizes = [1, 128], strides = [1, 1]} : vector<6x128xf32> to vector<1x128xf32>
    %40 = vector.shape_cast %39 : vector<1x128xf32> to vector<128xf32>
    %41 = vector.shape_cast %40 : vector<128xf32> to vector<1x128xf32>
    %42 = vector.broadcast %41 : vector<1x128xf32> to vector<128x128xf32>
    %43 = arith.addf %38, %42 : vector<128x128xf32>
    %cst_18 = arith.constant 0.000000e+00 : f32
    %44 = vector.broadcast %cst_18 : f32 to vector<128x128xf32>
    %45 = arith.maximumf %43, %44 : vector<128x128xf32>
    %46 = arith.truncf %45 : vector<128x128xf32> to vector<128x128xbf16>
    %c4 = arith.constant 4 : index
    %c0_19 = arith.constant 0 : index
    %c0_20 = arith.constant 0 : index
    %47 = vector.load %arg2[%c4, %c0_19, %c0_20] : memref<6x128x128xbf16, #tpu.memory_space<vmem>>, vector<1x128x128xbf16>
    %48 = vector.shape_cast %47 : vector<1x128x128xbf16> to vector<128x128xbf16>
    %cst_21 = arith.constant dense<0.000000e+00> : vector<128x128xf32>
    %49 = tpu.matmul %46, %48, %cst_21 {dimension_numbers = #tpu.dot_dimension_numbers<[1], [0], [0], [1], [0, 0, 1, 1], [], []>} : vector<128x128xbf16>, vector<128x128xbf16>, vector<128x128xf32> -> vector<128x128xf32>
    %50 = vector.extract_strided_slice %1 {offsets = [4, 0], sizes = [1, 128], strides = [1, 1]} : vector<6x128xf32> to vector<1x128xf32>
    %51 = vector.shape_cast %50 : vector<1x128xf32> to vector<128xf32>
    %52 = vector.shape_cast %51 : vector<128xf32> to vector<1x128xf32>
    %53 = vector.broadcast %52 : vector<1x128xf32> to vector<128x128xf32>
    %54 = arith.addf %49, %53 : vector<128x128xf32>
    %cst_22 = arith.constant 0.000000e+00 : f32
    %55 = vector.broadcast %cst_22 : f32 to vector<128x128xf32>
    %56 = arith.maximumf %54, %55 : vector<128x128xf32>
    %57 = arith.truncf %56 : vector<128x128xf32> to vector<128x128xbf16>
    %c5 = arith.constant 5 : index
    %c0_23 = arith.constant 0 : index
    %c0_24 = arith.constant 0 : index
    %58 = vector.load %arg2[%c5, %c0_23, %c0_24] : memref<6x128x128xbf16, #tpu.memory_space<vmem>>, vector<1x128x128xbf16>
    %59 = vector.shape_cast %58 : vector<1x128x128xbf16> to vector<128x128xbf16>
    %cst_25 = arith.constant dense<0.000000e+00> : vector<128x128xf32>
    %60 = tpu.matmul %57, %59, %cst_25 {dimension_numbers = #tpu.dot_dimension_numbers<[1], [0], [0], [1], [0, 0, 1, 1], [], []>} : vector<128x128xbf16>, vector<128x128xbf16>, vector<128x128xf32> -> vector<128x128xf32>
    %61 = vector.extract_strided_slice %1 {offsets = [5, 0], sizes = [1, 128], strides = [1, 1]} : vector<6x128xf32> to vector<1x128xf32>
    %62 = vector.shape_cast %61 : vector<1x128xf32> to vector<128xf32>
    %63 = vector.shape_cast %62 : vector<128xf32> to vector<1x128xf32>
    %64 = vector.broadcast %63 : vector<1x128xf32> to vector<128x128xf32>
    %65 = arith.addf %60, %64 : vector<128x128xf32>
    %66 = tpu.iota {dimensions = array<i32: 1>} : vector<128x128xi32>
    %c2_i32 = arith.constant 2 : i32
    %67 = vector.broadcast %c2_i32 : i32 to vector<128x128xi32>
    %68 = arith.cmpi slt, %66, %67 : vector<128x128xi32>
    %cst_26 = arith.constant -1.000000e+30 : f32
    %69 = vector.broadcast %cst_26 : f32 to vector<128x128xf32>
    %70 = arith.select %68, %65, %69 : vector<128x128xi1>, vector<128x128xf32>
    %cst_27 = arith.constant dense<0xFF800000> : vector<128xf32>
    %71 = vector.multi_reduction <maximumf>, %70, %cst_27 [1] : vector<128x128xf32> to vector<128xf32>
    %72 = vector.shape_cast %71 : vector<128xf32> to vector<128x1xf32>
    %73 = vector.broadcast %72 : vector<128x1xf32> to vector<128x128xf32>
    %74 = arith.subf %70, %73 : vector<128x128xf32>
    %75 = math.exp %74 : vector<128x128xf32>
    %cst_28 = arith.constant dense<0.000000e+00> : vector<128xf32>
    %76 = vector.multi_reduction <add>, %75, %cst_28 [1] : vector<128x128xf32> to vector<128xf32>
    %77 = vector.shape_cast %76 : vector<128xf32> to vector<128x1xf32>
    %78 = math.log %77 : vector<128x1xf32>
    %79 = vector.broadcast %78 : vector<128x1xf32> to vector<128x128xf32>
    %80 = arith.subf %74, %79 : vector<128x128xf32>
    %c0_29 = arith.constant 0 : index
    %c0_30 = arith.constant 0 : index
    %81 = vector.load %arg4[%c0_29, %c0_30] : memref<128x128xf32, #tpu.memory_space<vmem>>, vector<128x128xf32>
    tpu.vector_store %arg4[%c0_29, %c0_30], %80 {strides = array<i32>} : memref<128x128xf32, #tpu.memory_space<vmem>>, vector<128x128xf32>,
    return
  }
  func.func @transform_0(%arg0: i32) -> (i32, i32) {
    %c0_i32 = arith.constant 0 : i32
    %c0_i32_0 = arith.constant 0 : i32
    return %arg0, %c0_i32 : i32, i32
  }
  func.func @transform_1(%arg0: i32) -> (i32, i32, i32) {
    %c0_i32 = arith.constant 0 : i32
    %c0_i32_0 = arith.constant 0 : i32
    %c0_i32_1 = arith.constant 0 : i32
    %c0_i32_2 = arith.constant 0 : i32
    return %c0_i32, %c0_i32_0, %c0_i32_1 : i32, i32, i32
  }
  func.func @transform_2(%arg0: i32) -> (i32, i32) {
    %c0_i32 = arith.constant 0 : i32
    %c0_i32_0 = arith.constant 0 : i32
    %c0_i32_1 = arith.constant 0 : i32
    return %c0_i32, %c0_i32_0 : i32, i32
  }
  func.func @transform_3(%arg0: i32) -> (i32, i32) {
    %c0_i32 = arith.constant 0 : i32
    %c0_i32_0 = arith.constant 0 : i32
    return %arg0, %c0_i32 : i32, i32
  }
}

</mosaic_0001>

<llo_original>
// kernel: tpu_custom_call.1
$region0: #{tpu_custom_call.1}
  #allocation0 [shape = 'u32[]', space=smem, size = 0x4, offset = 0x4, fixed_abs, tag = 'smem constant byte address 0x4 - core index']
  #allocation1 [shape = 'u32[144,128]{1,0:T(1,128)}', space=vmem, size = 0x12000, scoped, tag = 'internal scratch']
  %s0 = inlined_call_operand.hbm [shape: f32[256,128], index: 0, kind: input, shape index: {}]
  %s1 = inlined_call_operand.hbm [shape: bf16[6,128,128], index: 1, kind: input, shape index: {}]
  %s2 = inlined_call_operand.hbm [shape: f32[6,128], index: 2, kind: input, shape index: {}]
  %s3 = inlined_call_operand.hbm [shape: f32[256,128], index: 3, kind: output, shape index: {}]
  %s4 = sld [smem:[#allocation0]]
  $region57: #{tpu_custom_call.1} parent=0
    _
  %s6 = ssub.s32 1, %s4
  %s7 = scalar_select 0, %s6, %s4
  $region1: #{tpu_custom_call.1} parent=0
    #allocation2 [shape = 'u8[131072]{0}', space=vmem, size = 0x20000, scoped, tag = 'input window, operand 0']
    #allocation3 [shape = 's32[2]{0}', space=sflag, size = 0x8, scoped, tag = 'scoped memory for tpu_custom_call.1']
    #allocation4 [shape = 's32[2]{0}', space=sflag, size = 0x8, scoped, tag = 'scoped memory for tpu_custom_call.1']
    #allocation5 [shape = 'u8[196608]{0}', space=vmem, size = 0x30000, scoped, tag = 'input window, operand 1, single buffered']
    #allocation6 [shape = 's32[1]{0}', space=sflag, size = 0x4, scoped, tag = 'scoped memory for tpu_custom_call.1']
    #allocation7 [shape = 'u8[4096]{0}', space=vmem, size = 0x1000, scoped, tag = 'input window, operand 2, single buffered']
    #allocation8 [shape = 'u8[131072]{0}', space=vmem, size = 0x20000, scoped, tag = 'output window, operand 0']
    %8 = vsyncpa [#allocation3], 0
    %s9 = scalar_lea.sflag [#allocation3], 1
    %10 = vsyncpa %s9, 0
    %11 = vsyncpa [#allocation6], 0
    %12 = vsyncpa [#allocation4], 0
    %s13 = scalar_lea.sflag [#allocation4], 1
    %14 = vsyncpa %s13, 0
    loop: start=0, step=1, limit=4
    $region2: #{tpu_custom_call.1} parent=1 // loop_pre_header
      _
    $region3: #{tpu_custom_call.1} parent=1 // loop_header
      %s16 = sphi 0, %s20
      %p17 = scmp.ge.s32.totalorder %s16, 4
      %s26 = sphi 0, %s28
      %s29 = sphi 0, %s26
      %s30 = sphi 0, %s29
      %s46 = sphi 0, %s30
      %s50 = sphi 0, %s50
      %s52 = sphi 0, %s50
      %s53 = sphi 0, %s52
      %s67 = sphi 0, %s53
      %s71 = sphi 0, %s71
      %s73 = sphi 0, %s71
      %s74 = sphi 0, %s73
      %s88 = sphi 0, %s74
      %s94 = sphi 0, %s96
      %s97 = sphi 0, %s94
      %s98 = sphi 0, %s97
      %s114 = sphi 0, %s98
    $region4: #{tpu_custom_call.1} parent=1 // loop_header_branch
      %19 = sbr.rel (%p17) target = $region8
    $region5: #{tpu_custom_call.1} parent=1 // loop_body
      %s21 = ssub.s32 %s16, 1
      %s22 = ssub.s32 %s16, 2
      %s23 = sadd.s32 %s16, 1
      %s24 = ssub.s32 %s16, %s23
      %p25 = scmp.eq.s32.totalorder %s24, 0
      %s27 = sadd.s32 %s26, 1
      %s28 = scalar_select %p25, %s26, %s27
      %p31 = pneg %p25
      %p32 = scmp.eq.s32.totalorder %s16, 1
      %p33 = por %p31, %p32
      %p34 = scmp.ne.s32.totalorder %s26, %s29
      %p35 = scmp.eq.s32.totalorder %s16, 0
      %p36 = por %p34, %p35
      %p37 = scmp.ne.s32.totalorder %s26, %s29
      %p38 = scmp.eq.s32.totalorder %s21, 1
      %p39 = por %p37, %p38
      %p40 = scmp.ne.s32.totalorder %s29, %s30
      %p41 = scmp.eq.s32.totalorder %s21, 0
      %p42 = por %p40, %p41
      %p43 = scmp.ne.s32.totalorder %s29, %s30
      %p44 = scmp.eq.s32.totalorder %s22, 1
      %p45 = por %p43, %p44
      %p47 = scmp.ne.s32.totalorder %s30, %s46
      %p48 = scmp.eq.s32.totalorder %s22, 0
      %p49 = por %p47, %p48
      %s51 = sadd.s32 %s50, 1
      %p54 = scmp.eq.s32.totalorder %s16, 1
      %p55 = scmp.ne.s32.totalorder %s50, %s52
      %p56 = scmp.eq.s32.totalorder %s16, 0
      %p57 = por %p55, %p56
      %p58 = scmp.ne.s32.totalorder %s50, %s52
      %p59 = scmp.eq.s32.totalorder %s21, 1
      %p60 = por %p58, %p59
      %p61 = scmp.ne.s32.totalorder %s52, %s53
      %p62 = scmp.eq.s32.totalorder %s21, 0
      %p63 = por %p61, %p62
      %p64 = scmp.ne.s32.totalorder %s52, %s53
      %p65 = scmp.eq.s32.totalorder %s22, 1
      %p66 = por %p64, %p65
      %p68 = scmp.ne.s32.totalorder %s53, %s67
      %p69 = scmp.eq.s32.totalorder %s22, 0
      %p70 = por %p68, %p69
      %s72 = sadd.s32 %s71, 1
      %p75 = scmp.eq.s32.totalorder %s16, 1
      %p76 = scmp.ne.s32.totalorder %s71, %s73
      %p77 = scmp.eq.s32.totalorder %s16, 0
      %p78 = por %p76, %p77
      %p79 = scmp.ne.s32.totalorder %s71, %s73
      %p80 = scmp.eq.s32.totalorder %s21, 1
      %p81 = por %p79, %p80
      %p82 = scmp.ne.s32.totalorder %s73, %s74
      %p83 = scmp.eq.s32.totalorder %s21, 0
      %p84 = por %p82, %p83
      %p85 = scmp.ne.s32.totalorder %s73, %s74
      %p86 = scmp.eq.s32.totalorder %s22, 1
      %p87 = por %p85, %p86
      %p89 = scmp.ne.s32.totalorder %s74, %s88
      %p90 = scmp.eq.s32.totalorder %s22, 0
      %p91 = por %p89, %p90
      %s92 = ssub.s32 %s16, %s23
      %p93 = scmp.eq.s32.totalorder %s92, 0
      %s95 = sadd.s32 %s94, 1
      %s96 = scalar_select %p93, %s94, %s95
      %p99 = pneg %p93
      %p100 = scmp.eq.s32.totalorder %s16, 1
      %p101 = por %p99, %p100
      %p102 = scmp.ne.s32.totalorder %s94, %s97
      %p103 = scmp.eq.s32.totalorder %s16, 0
      %p104 = por %p102, %p103
      %p105 = scmp.ne.s32.totalorder %s94, %s97
      %p106 = scmp.eq.s32.totalorder %s21, 1
      %p107 = por %p105, %p106
      %p108 = scmp.ne.s32.totalorder %s97, %s98
      %p109 = scmp.eq.s32.totalorder %s21, 0
      %p110 = por %p108, %p109
      %p111 = scmp.ne.s32.totalorder %s97, %s98
      %p112 = scmp.eq.s32.totalorder %s22, 1
      %p113 = por %p111, %p112
      %p115 = scmp.ne.s32.totalorder %s98, %s114
      %p116 = scmp.eq.s32.totalorder %s22, 0
      %p117 = por %p115, %p116
      %p118 = scmp.le.s32.totalorder 1, %s16
      %p119 = scmp.lt.s32.totalorder %s16, 3
      %p120 = pnand %p118, %p119
      %p121 = pneg %p120
      // Predicated region
      $region9: #{tpu_custom_call.1} parent=5 // pred_check
        _
      $region10: #{tpu_custom_call.1} parent=5 // pred_check_branch
        %123 = sbr.rel (%p120) target = $region12
      $region11: #{tpu_custom_call.1} parent=5 // pred_region
        %s124 = ssub.s32 %s16, 1
        // Predicated region
        $region13: #{tpu_custom_call.1} parent=11 // pred_check
          %p125 = pneg %p63
        $region14: #{tpu_custom_call.1} parent=11 // pred_check_branch
          %127 = sbr.rel (%p125) target = $region16
        $region15: #{tpu_custom_call.1} parent=11 // pred_region
          %s129 = ssub.s32 6144, 6144
          %130 = vsyncadd [#allocation6], %s129
          %s131 = sshll.u32 [#allocation5], 4
          %s132 = int_to_ptr.vmem [resolvable:$true] %s131
          %137 = dma.hbm_to_vmem [thread:$0]  %s1, 6144, %s132, [#allocation6], 64, 64, 4
        $region16: #{tpu_custom_call.1} parent=11 // pred_fallthru
          _
        // Predicated region
        $region17: #{tpu_custom_call.1} parent=11 // pred_check
          %p138 = pneg %p84
        $region18: #{tpu_custom_call.1} parent=11 // pred_check_branch
          %140 = sbr.rel (%p138) target = $region20
        $region19: #{tpu_custom_call.1} parent=11 // pred_region
          %s142 = ssub.s32 128, 128
          %143 = vsyncadd [#allocation6], %s142
          %s145 = sshll.u32 [#allocation7], 4
          %s146 = int_to_ptr.vmem [resolvable:$true] %s145
          %148 = dma.hbm_to_vmem [thread:$0]  %s2, 128, %s146, [#allocation6]
        $region20: #{tpu_custom_call.1} parent=11 // pred_fallthru
          _
      $region12: #{tpu_custom_call.1} parent=5 // pred_fallthru
        _
      %p149 = scmp.lt.s32.totalorder %s16, 2
      // Predicated region
      $region21: #{tpu_custom_call.1} parent=5 // pred_check
        %p150 = pneg %p149
      $region22: #{tpu_custom_call.1} parent=5 // pred_check_branch
        %152 = sbr.rel (%p150) target = $region24
      $region23: #{tpu_custom_call.1} parent=5 // pred_region
        // Predicated region
        $region25: #{tpu_custom_call.1} parent=23 // pred_check
          %p153 = pneg %p36
        $region26: #{tpu_custom_call.1} parent=23 // pred_check_branch
          %155 = sbr.rel (%p153) target = $region28
        $region27: #{tpu_custom_call.1} parent=23 // pred_region
          %s156 = sand.u32 %s26, 1
          %s157 = scalar_lea.sflag [#allocation3], %s156
          %s158 = sand.u32 %s26, 1
          %s159 = smul.addr %s158, 128
          %s160 = scalar_lea.vmem [#allocation2], %s159
          %s161 = smul.u32 16, %s16
          %s163 = ssub.s32 2048, 2048
          %164 = vsyncadd %s157, %s163
          %s165 = smul.addr %s161, 128
          %s166 = scalar_lea.hbm %s0, %s165
          %s167 = sshll.u32 %s160, 4
          %s168 = int_to_ptr.vmem [resolvable:$true] %s167
          %173 = dma.hbm_to_vmem [thread:$0]  %s166, 2048, %s168, %s157, 128, 128, 8
        $region28: #{tpu_custom_call.1} parent=23 // pred_fallthru
          _
      $region24: #{tpu_custom_call.1} parent=5 // pred_fallthru
        _
      %p174 = scmp.le.s32.totalorder 1, %s16
      %p175 = scmp.lt.s32.totalorder %s16, 3
      %p176 = pnand %p174, %p175
      %p177 = pneg %p176
      // Predicated region
      $region29: #{tpu_custom_call.1} parent=5 // pred_check
        _
      $region30: #{tpu_custom_call.1} parent=5 // pred_check_branch
        %179 = sbr.rel (%p176) target = $region32
      $region31: #{tpu_custom_call.1} parent=5 // pred_region
        %s180 = ssub.s32 %s16, 1
        %s181 = sand.u32 %s29, 1
        %s182 = scalar_lea.sflag [#allocation3], %s181
        %s183 = sand.u32 %s29, 1
        %s184 = smul.addr %s183, 128
        %s185 = scalar_lea.vmem [#allocation2], %s184
        // Predicated region
        $region33: #{tpu_custom_call.1} parent=31 // pred_check
          %p186 = pneg %p42
        $region34: #{tpu_custom_call.1} parent=31 // pred_check_branch
          %188 = sbr.rel (%p186) target = $region36
        $region35: #{tpu_custom_call.1} parent=31 // pred_region
          %189 = dma.done %s182, 2048
        $region36: #{tpu_custom_call.1} parent=31 // pred_fallthru
          _
        // Predicated region
        $region37: #{tpu_custom_call.1} parent=31 // pred_check
          %p190 = pneg %p63
        $region38: #{tpu_custom_call.1} parent=31 // pred_check_branch
          %192 = sbr.rel (%p190) target = $region40
        $region39: #{tpu_custom_call.1} parent=31 // pred_region
          %193 = dma.done [#allocation6], 6144
        $region40: #{tpu_custom_call.1} parent=31 // pred_fallthru
          _
        // Predicated region
        $region41: #{tpu_custom_call.1} parent=31 // pred_check
          %p194 = pneg %p84
        $region42: #{tpu_custom_call.1} parent=31 // pred_check_branch
          %196 = sbr.rel (%p194) target = $region44
        $region43: #{tpu_custom_call.1} parent=31 // pred_region
          %197 = dma.done [#allocation6], 128
        $region44: #{tpu_custom_call.1} parent=31 // pred_fallthru
          _
        %s198 = sand.u32 %s29, 1
        %s199 = scalar_lea.sflag [#allocation3], %s198
        %s200 = sand.u32 %s29, 1
        %s201 = smul.addr %s200, 128
        %s202 = scalar_lea.vmem [#allocation2], %s201
        %p203 = pneg %p42
        %p204 = pneg %p39
        %p205 = pneg %p63
        %p206 = pneg %p60
        %p207 = pneg %p84
        %p208 = pneg %p81
        %p209 = pneg %p110
        %p210 = pneg %p107
        %s211 = sand.u32 %s97, 1
        %s212 = scalar_lea.sflag [#allocation4], %s211
        %s213 = sand.u32 %s97, 1
        %s214 = smul.addr %s213, 128
        %s215 = scalar_lea.vmem [#allocation8], %s214
        %s216 = smul.u32 16, %s21
        %s217 = smul.u32 16, %s21
        %v219 = vld [vmem:[%s185] sm:$0xff]
        %v220 = vld [vmem:[%s185 + $0x8] sm:$0xff]
        %v221 = vld [vmem:[%s185 + $0x10] sm:$0xff]
        %v222 = vld [vmem:[%s185 + $0x18] sm:$0xff]
        %v223 = vld [vmem:[%s185 + $0x20] sm:$0xff]
        %v224 = vld [vmem:[%s185 + $0x28] sm:$0xff]
        %v225 = vld [vmem:[%s185 + $0x30] sm:$0xff]
        %v226 = vld [vmem:[%s185 + $0x38] sm:$0xff]
        %v227 = vld [vmem:[%s185 + $0x40] sm:$0xff]
        %v228 = vld [vmem:[%s185 + $0x48] sm:$0xff]
        %v229 = vld [vmem:[%s185 + $0x50] sm:$0xff]
        %v230 = vld [vmem:[%s185 + $0x58] sm:$0xff]
        %v231 = vld [vmem:[%s185 + $0x60] sm:$0xff]
        %v232 = vld [vmem:[%s185 + $0x68] sm:$0xff]
        %v233 = vld [vmem:[%s185 + $0x70] sm:$0xff]
        %v234 = vld [vmem:[%s185 + $0x78] sm:$0xff]
        %v235 = vld [vmem:[#allocation7] sm:$0x3f]
        %v236 = vpack.c.bf16 %v220, %v219
        %v237 = vpack.c.bf16 %v222, %v221
        %v238 = vpack.c.bf16 %v224, %v223
        %v239 = vpack.c.bf16 %v226, %v225
        %v240 = vpack.c.bf16 %v228, %v227
        %v241 = vpack.c.bf16 %v230, %v229
        %v242 = vpack.c.bf16 %v232, %v231
        %v243 = vpack.c.bf16 %v234, %v233
        %v244 = vld [vmem:[#allocation5] sm:$0xf]
        %v245 = vld [vmem:[#allocation5 + $0x4] sm:$0xf]
        %v246 = vld [vmem:[#allocation5 + $0x8] sm:$0xf]
        %v247 = vld [vmem:[#allocation5 + $0xc] sm:$0xf]
        %v248 = vld [vmem:[#allocation5 + $0x10] sm:$0xf]
        %v249 = vld [vmem:[#allocation5 + $0x14] sm:$0xf]
        %v250 = vld [vmem:[#allocation5 + $0x18] sm:$0xf]
        %v251 = vld [vmem:[#allocation5 + $0x1c] sm:$0xf]
        %v252 = vld [vmem:[#allocation5 + $0x20] sm:$0xf]
        %v253 = vld [vmem:[#allocation5 + $0x24] sm:$0xf]
        %v254 = vld [vmem:[#allocation5 + $0x28] sm:$0xf]
        %v255 = vld [vmem:[#allocation5 + $0x2c] sm:$0xf]
        %v256 = vld [vmem:[#allocation5 + $0x30] sm:$0xf]
        %v257 = vld [vmem:[#allocation5 + $0x34] sm:$0xf]
        %v258 = vld [vmem:[#allocation5 + $0x38] sm:$0xf]
        %v259 = vld [vmem:[#allocation5 + $0x3c] sm:$0xf]
        %v260 = vlaneseq
        %v261 = vshrl.u32 %v260, 7
        %v262 = vsub.s32 0, %v261
        %v263 = vrot.slane %v235, %v262
        %v280 = vunpack.c.l.b16 %v244
        %v281 = vunpack.c.l.b16 %v245
        %v282 = vunpack.c.l.b16 %v246
        %v283 = vunpack.c.l.b16 %v247
        %v284 = vunpack.c.l.b16 %v248
        %v285 = vunpack.c.l.b16 %v249
        %v286 = vunpack.c.l.b16 %v250
        %v287 = vunpack.c.l.b16 %v251
        %v288 = vunpack.c.l.b16 %v252
        %v289 = vunpack.c.l.b16 %v253
        %v290 = vunpack.c.l.b16 %v254
        %v291 = vunpack.c.l.b16 %v255
        %v292 = vunpack.c.l.b16 %v256
        %v293 = vunpack.c.l.b16 %v257
        %v294 = vunpack.c.l.b16 %v258
        %v295 = vunpack.c.l.b16 %v259
        %v296 = vpack.c.b16 %v281, %v280
        %v297 = vpack.c.b16 %v283, %v282
        %v298 = vpack.c.b16 %v285, %v284
        %v299 = vpack.c.b16 %v287, %v286
        %v300 = vpack.c.b16 %v289, %v288
        %v301 = vpack.c.b16 %v291, %v290
        %v302 = vpack.c.b16 %v293, %v292
        %v303 = vpack.c.b16 %v295, %v294
        %312 = vmatprep.subr.bf16.mxu0 0
        %313 = vmatpush1.bf16.msra.mxu0 %v296
        %314 = vmatprep.subr.bf16.mxu0 0
        %315 = vmatpush1.bf16.msra.mxu0 %v297
        %316 = vmatprep.subr.bf16.mxu0 0
        %317 = vmatpush1.bf16.msra.mxu0 %v298
        %318 = vmatprep.subr.bf16.mxu0 0
        %319 = vmatpush1.bf16.msra.mxu0 %v299
        %320 = vmatprep.subr.bf16.mxu0 0
        %321 = vmatpush1.bf16.msra.mxu0 %v300
        %322 = vmatprep.subr.bf16.mxu0 0
        %323 = vmatpush1.bf16.msra.mxu0 %v301
        %324 = vmatprep.subr.bf16.mxu0 0
        %325 = vmatpush1.bf16.msra.mxu0 %v302
        %326 = vmatprep.subr.bf16.mxu0 0
        %327 = vmatpush1.bf16.msra.mxu0 %v303
        %328 = vmatprep.subr.bf16.mxu0 0
        %329 = vmatpush1.bf16.msra.mxu0 0
        %330 = vmatprep.subr.bf16.mxu0 0
        %331 = vmatpush1.bf16.msra.mxu0 0
        %332 = vmatprep.subr.bf16.mxu0 0
        %333 = vmatpush1.bf16.msra.mxu0 0
        %334 = vmatprep.subr.bf16.mxu0 0
        %335 = vmatpush1.bf16.msra.mxu0 0
        %336 = vmatprep.subr.bf16.mxu0 0
        %337 = vmatpush1.bf16.msra.mxu0 0
        %338 = vmatprep.subr.bf16.mxu0 0
        %339 = vmatpush1.bf16.msra.mxu0 0
        %340 = vmatprep.subr.bf16.mxu0 0
        %341 = vmatpush1.bf16.msra.mxu0 0
        %342 = vmatprep.subr.bf16.mxu0 0
        %343 = vmatpush1.bf16.msra.mxu0 0
        %344 = vmatprep.mubr.bf16.mxu0 0
        %345 = vmatmul.mubr.bf16.gmra.mrb[0].mxu0 %v236
        %v346 = vpop.f32.mrb[0].mxu0
        %v347 = vadd.f32 %v263, %v346
        %v348 = vpop.f32.mrb[0].mxu0
        %v349 = vpop.f32.mrb[0].mxu0
        %v350 = vadd.f32 %v263, %v349
        %v351 = vpop.f32.mrb[0].mxu0
        %352 = vmatprep.mubr.bf16.mxu0 0
        %353 = vmatmul.mubr.bf16.gmra.mrb[0].mxu0 %v237
        %v354 = vpop.f32.mrb[0].mxu0
        %v355 = vadd.f32 %v263, %v354
        %v356 = vpop.f32.mrb[0].mxu0
        %v357 = vpop.f32.mrb[0].mxu0
        %v358 = vadd.f32 %v263, %v357
        %v359 = vpop.f32.mrb[0].mxu0
        %360 = vmatprep.mubr.bf16.mxu0 0
        %361 = vmatmul.mubr.bf16.gmra.mrb[0].mxu0 %v238
        %v362 = vpop.f32.mrb[0].mxu0
        %v363 = vadd.f32 %v263, %v362
        %v364 = vpop.f32.mrb[0].mxu0
        %v365 = vpop.f32.mrb[0].mxu0
        %v366 = vadd.f32 %v263, %v365
        %v367 = vpop.f32.mrb[0].mxu0
        %368 = vmatprep.mubr.bf16.mxu0 0
        %369 = vmatmul.mubr.bf16.gmra.mrb[0].mxu0 %v239
        %v370 = vpop.f32.mrb[0].mxu0
        %v371 = vadd.f32 %v263, %v370
        %v372 = vpop.f32.mrb[0].mxu0
        %v373 = vpop.f32.mrb[0].mxu0
        %v374 = vadd.f32 %v263, %v373
        %v375 = vpop.f32.mrb[0].mxu0
        %376 = vmatprep.mubr.bf16.mxu0 0
        %377 = vmatmul.mubr.bf16.gmra.mrb[0].mxu0 %v240
        %v378 = vpop.f32.mrb[0].mxu0
        %v379 = vadd.f32 %v263, %v378
        %v380 = vpop.f32.mrb[0].mxu0
        %v381 = vpop.f32.mrb[0].mxu0
        %v382 = vadd.f32 %v263, %v381
        %v383 = vpop.f32.mrb[0].mxu0
        %384 = vmatprep.mubr.bf16.mxu0 0
        %385 = vmatmul.mubr.bf16.gmra.mrb[0].mxu0 %v241
        %v386 = vpop.f32.mrb[0].mxu0
        %v387 = vadd.f32 %v263, %v386
        %v388 = vpop.f32.mrb[0].mxu0
        %v389 = vpop.f32.mrb[0].mxu0
        %v390 = vadd.f32 %v263, %v389
        %v391 = vpop.f32.mrb[0].mxu0
        %392 = vmatprep.mubr.bf16.mxu0 0
        %393 = vmatmul.mubr.bf16.gmra.mrb[0].mxu0 %v242
        %v394 = vpop.f32.mrb[0].mxu0
        %v395 = vadd.f32 %v263, %v394
        %v396 = vpop.f32.mrb[0].mxu0
        %v397 = vpop.f32.mrb[0].mxu0
        %v398 = vadd.f32 %v263, %v397
        %v399 = vpop.f32.mrb[0].mxu0
        %400 = vmatprep.mubr.bf16.mxu0 0
        %401 = vmatmul.mubr.bf16.gmra.mrb[0].mxu0 %v243
        %v402 = vpop.f32.mrb[0].mxu0
        %v403 = vadd.f32 %v263, %v402
        %v404 = vpop.f32.mrb[0].mxu0
        %v405 = vpop.f32.mrb[0].mxu0
        %v406 = vadd.f32 %v263, %v405
        %v407 = vpop.f32.mrb[0].mxu0
        %408 = vdwg.mxu0
        %v409 = vmax.f32 %v347, 0.0
        %v410 = vmax.f32 %v350, 0.0
        %v411 = vmax.f32 %v355, 0.0
        %v412 = vmax.f32 %v358, 0.0
        %v413 = vmax.f32 %v363, 0.0
        %v414 = vmax.f32 %v366, 0.0
        %v415 = vmax.f32 %v371, 0.0
        %v416 = vmax.f32 %v374, 0.0
        %v417 = vmax.f32 %v379, 0.0
        %v418 = vmax.f32 %v382, 0.0
        %v419 = vmax.f32 %v387, 0.0
        %v420 = vmax.f32 %v390, 0.0
        %v421 = vmax.f32 %v395, 0.0
        %v422 = vmax.f32 %v398, 0.0
        %v423 = vmax.f32 %v403, 0.0
        %v424 = vmax.f32 %v406, 0.0
        %v425 = vpack.c.bf16 %v410, %v409
        %v426 = vpack.c.bf16 %v412, %v411
        %v427 = vpack.c.bf16 %v414, %v413
        %v428 = vpack.c.bf16 %v416, %v415
        %v429 = vpack.c.bf16 %v418, %v417
        %v430 = vpack.c.bf16 %v420, %v419
        %v431 = vpack.c.bf16 %v422, %v421
        %v432 = vpack.c.bf16 %v424, %v423
        %s433 = scalar_lea.vmem [#allocation5], 64
        %v434 = vld [vmem:[%s433] sm:$0xf]
        %v435 = vld [vmem:[%s433 + $0x4] sm:$0xf]
        %v436 = vld [vmem:[%s433 + $0x8] sm:$0xf]
        %v437 = vld [vmem:[%s433 + $0xc] sm:$0xf]
        %v438 = vld [vmem:[%s433 + $0x10] sm:$0xf]
        %v439 = vld [vmem:[%s433 + $0x14] sm:$0xf]
        %v440 = vld [vmem:[%s433 + $0x18] sm:$0xf]
        %v441 = vld [vmem:[%s433 + $0x1c] sm:$0xf]
        %v442 = vld [vmem:[%s433 + $0x20] sm:$0xf]
        %v443 = vld [vmem:[%s433 + $0x24] sm:$0xf]
        %v444 = vld [vmem:[%s433 + $0x28] sm:$0xf]
        %v445 = vld [vmem:[%s433 + $0x2c] sm:$0xf]
        %v446 = vld [vmem:[%s433 + $0x30] sm:$0xf]
        %v447 = vld [vmem:[%s433 + $0x34] sm:$0xf]
        %v448 = vld [vmem:[%s433 + $0x38] sm:$0xf]
        %v449 = vld [vmem:[%s433 + $0x3c] sm:$0xf]
        %v450 = vlaneseq
        %v451 = vshrl.u32 %v450, 7
        %v452 = vsub.s32 1, %v451
        %v453 = vrot.slane %v235, %v452
        %v470 = vunpack.c.l.b16 %v434
        %v471 = vunpack.c.l.b16 %v435
        %v472 = vunpack.c.l.b16 %v436
        %v473 = vunpack.c.l.b16 %v437
        %v474 = vunpack.c.l.b16 %v438
        %v475 = vunpack.c.l.b16 %v439
        %v476 = vunpack.c.l.b16 %v440
        %v477 = vunpack.c.l.b16 %v441
        %v478 = vunpack.c.l.b16 %v442
        %v479 = vunpack.c.l.b16 %v443
        %v480 = vunpack.c.l.b16 %v444
        %v481 = vunpack.c.l.b16 %v445
        %v482 = vunpack.c.l.b16 %v446
        %v483 = vunpack.c.l.b16 %v447
        %v484 = vunpack.c.l.b16 %v448
        %v485 = vunpack.c.l.b16 %v449
        %v486 = vpack.c.b16 %v471, %v470
        %v487 = vpack.c.b16 %v473, %v472
        %v488 = vpack.c.b16 %v475, %v474
        %v489 = vpack.c.b16 %v477, %v476
        %v490 = vpack.c.b16 %v479, %v478
        %v491 = vpack.c.b16 %v481, %v480
        %v492 = vpack.c.b16 %v483, %v482
        %v493 = vpack.c.b16 %v485, %v484
        %502 = vmatprep.subr.bf16.mxu0 0
        %503 = vmatpush1.bf16.msra.mxu0 %v486
        %504 = vmatprep.subr.bf16.mxu0 0
        %505 = vmatpush1.bf16.msra.mxu0 %v487
        %506 = vmatprep.subr.bf16.mxu0 0
        %507 = vmatpush1.bf16.msra.mxu0 %v488
        %508 = vmatprep.subr.bf16.mxu0 0
        %509 = vmatpush1.bf16.msra.mxu0 %v489
        %510 = vmatprep.subr.bf16.mxu0 0
        %511 = vmatpush1.bf16.msra.mxu0 %v490
        %512 = vmatprep.subr.bf16.mxu0 0
        %513 = vmatpush1.bf16.msra.mxu0 %v491
        %514 = vmatprep.subr.bf16.mxu0 0
        %515 = vmatpush1.bf16.msra.mxu0 %v492
        %516 = vmatprep.subr.bf16.mxu0 0
        %517 = vmatpush1.bf16.msra.mxu0 %v493
        %518 = vmatprep.subr.bf16.mxu0 0
        %519 = vmatpush1.bf16.msra.mxu0 0
        %520 = vmatprep.subr.bf16.mxu0 0
        %521 = vmatpush1.bf16.msra.mxu0 0
        %522 = vmatprep.subr.bf16.mxu0 0
        %523 = vmatpush1.bf16.msra.mxu0 0
        %524 = vmatprep.subr.bf16.mxu0 0
        %525 = vmatpush1.bf16.msra.mxu0 0
        %526 = vmatprep.subr.bf16.mxu0 0
        %527 = vmatpush1.bf16.msra.mxu0 0
        %528 = vmatprep.subr.bf16.mxu0 0
        %529 = vmatpush1.bf16.msra.mxu0 0
        %530 = vmatprep.subr.bf16.mxu0 0
        %531 = vmatpush1.bf16.msra.mxu0 0
        %532 = vmatprep.subr.bf16.mxu0 0
        %533 = vmatpush1.bf16.msra.mxu0 0
        %534 = vmatprep.mubr.bf16.mxu0 0
        %535 = vmatmul.mubr.bf16.gmra.mrb[0].mxu0 %v425
        %v536 = vpop.f32.mrb[0].mxu0
        %v537 = vadd.f32 %v453, %v536
        %v538 = vpop.f32.mrb[0].mxu0
        %v539 = vpop.f32.mrb[0].mxu0
        %v540 = vadd.f32 %v453, %v539
        %v541 = vpop.f32.mrb[0].mxu0
        %542 = vmatprep.mubr.bf16.mxu0 0
        %543 = vmatmul.mubr.bf16.gmra.mrb[0].mxu0 %v426
        %v544 = vpop.f32.mrb[0].mxu0
        %v545 = vadd.f32 %v453, %v544
        %v546 = vpop.f32.mrb[0].mxu0
        %v547 = vpop.f32.mrb[0].mxu0
        %v548 = vadd.f32 %v453, %v547
        %v549 = vpop.f32.mrb[0].mxu0
        %550 = vmatprep.mubr.bf16.mxu0 0
        %551 = vmatmul.mubr.bf16.gmra.mrb[0].mxu0 %v427
        %v552 = vpop.f32.mrb[0].mxu0
        %v553 = vadd.f32 %v453, %v552
        %v554 = vpop.f32.mrb[0].mxu0
        %v555 = vpop.f32.mrb[0].mxu0
        %v556 = vadd.f32 %v453, %v555
        %v557 = vpop.f32.mrb[0].mxu0
        %558 = vmatprep.mubr.bf16.mxu0 0
        %559 = vmatmul.mubr.bf16.gmra.mrb[0].mxu0 %v428
        %v560 = vpop.f32.mrb[0].mxu0
        %v561 = vadd.f32 %v453, %v560
        %v562 = vpop.f32.mrb[0].mxu0
        %v563 = vpop.f32.mrb[0].mxu0
        %v564 = vadd.f32 %v453, %v563
        %v565 = vpop.f32.mrb[0].mxu0
        %566 = vmatprep.mubr.bf16.mxu0 0
        %567 = vmatmul.mubr.bf16.gmra.mrb[0].mxu0 %v429
        %v568 = vpop.f32.mrb[0].mxu0
        %v569 = vadd.f32 %v453, %v568
        %v570 = vpop.f32.mrb[0].mxu0
        %v571 = vpop.f32.mrb[0].mxu0
        %v572 = vadd.f32 %v453, %v571
        %v573 = vpop.f32.mrb[0].mxu0
        %574 = vmatprep.mubr.bf16.mxu0 0
        %575 = vmatmul.mubr.bf16.gmra.mrb[0].mxu0 %v430
        %v576 = vpop.f32.mrb[0].mxu0
        %v577 = vadd.f32 %v453, %v576
        %v578 = vpop.f32.mrb[0].mxu0
        %v579 = vpop.f32.mrb[0].mxu0
        %v580 = vadd.f32 %v453, %v579
        %v581 = vpop.f32.mrb[0].mxu0
        %582 = vmatprep.mubr.bf16.mxu0 0
        %583 = vmatmul.mubr.bf16.gmra.mrb[0].mxu0 %v431
        %v584 = vpop.f32.mrb[0].mxu0
        %v585 = vadd.f32 %v453, %v584
        %v586 = vpop.f32.mrb[0].mxu0
        %v587 = vpop.f32.mrb[0].mxu0
        %v588 = vadd.f32 %v453, %v587
        %v589 = vpop.f32.mrb[0].mxu0
        %590 = vmatprep.mubr.bf16.mxu0 0
        %591 = vmatmul.mubr.bf16.gmra.mrb[0].mxu0 %v432
        %v592 = vpop.f32.mrb[0].mxu0
        %v593 = vadd.f32 %v453, %v592
        %v594 = vpop.f32.mrb[0].mxu0
        %v595 = vpop.f32.mrb[0].mxu0
        %v596 = vadd.f32 %v453, %v595
        %v597 = vpop.f32.mrb[0].mxu0
        %598 = vdwg.mxu0
        %v599 = vmax.f32 %v537, 0.0
        %v600 = vmax.f32 %v540, 0.0
        %v601 = vmax.f32 %v545, 0.0
        %v602 = vmax.f32 %v548, 0.0
        %v603 = vmax.f32 %v553, 0.0
        %v604 = vmax.f32 %v556, 0.0
        %v605 = vmax.f32 %v561, 0.0
        %v606 = vmax.f32 %v564, 0.0
        %v607 = vmax.f32 %v569, 0.0
        %v608 = vmax.f32 %v572, 0.0
        %v609 = vmax.f32 %v577, 0.0
        %v610 = vmax.f32 %v580, 0.0
        %v611 = vmax.f32 %v585, 0.0
        %v612 = vmax.f32 %v588, 0.0
        %v613 = vmax.f32 %v593, 0.0
        %v614 = vmax.f32 %v596, 0.0
        %v615 = vpack.c.bf16 %v600, %v599
        %v616 = vpack.c.bf16 %v602, %v601
        %v617 = vpack.c.bf16 %v604, %v603
        %v618 = vpack.c.bf16 %v606, %v605
        %v619 = vpack.c.bf16 %v608, %v607
        %v620 = vpack.c.bf16 %v610, %v609
        %v621 = vpack.c.bf16 %v612, %v611
        %v622 = vpack.c.bf16 %v614, %v613
        %s623 = scalar_lea.vmem [#allocation5], 128
        %v624 = vld [vmem:[%s623] sm:$0xf]
        %v625 = vld [vmem:[%s623 + $0x4] sm:$0xf]
        %v626 = vld [vmem:[%s623 + $0x8] sm:$0xf]
        %v627 = vld [vmem:[%s623 + $0xc] sm:$0xf]
        %v628 = vld [vmem:[%s623 + $0x10] sm:$0xf]
        %v629 = vld [vmem:[%s623 + $0x14] sm:$0xf]
        %v630 = vld [vmem:[%s623 + $0x18] sm:$0xf]
        %v631 = vld [vmem:[%s623 + $0x1c] sm:$0xf]
        %v632 = vld [vmem:[%s623 + $0x20] sm:$0xf]
        %v633 = vld [vmem:[%s623 + $0x24] sm:$0xf]
        %v634 = vld [vmem:[%s623 + $0x28] sm:$0xf]
        %v635 = vld [vmem:[%s623 + $0x2c] sm:$0xf]
        %v636 = vld [vmem:[%s623 + $0x30] sm:$0xf]
        %v637 = vld [vmem:[%s623 + $0x34] sm:$0xf]
        %v638 = vld [vmem:[%s623 + $0x38] sm:$0xf]
        %v639 = vld [vmem:[%s623 + $0x3c] sm:$0xf]
        %v640 = vlaneseq
        %v641 = vshrl.u32 %v640, 7
        %v642 = vsub.s32 2, %v641
        %v643 = vrot.slane %v235, %v642
        %v660 = vunpack.c.l.b16 %v624
        %v661 = vunpack.c.l.b16 %v625
        %v662 = vunpack.c.l.b16 %v626
        %v663 = vunpack.c.l.b16 %v627
        %v664 = vunpack.c.l.b16 %v628
        %v665 = vunpack.c.l.b16 %v629
        %v666 = vunpack.c.l.b16 %v630
        %v667 = vunpack.c.l.b16 %v631
        %v668 = vunpack.c.l.b16 %v632
        %v669 = vunpack.c.l.b16 %v633
        %v670 = vunpack.c.l.b16 %v634
        %v671 = vunpack.c.l.b16 %v635
        %v672 = vunpack.c.l.b16 %v636
        %v673 = vunpack.c.l.b16 %v637
        %v674 = vunpack.c.l.b16 %v638
        %v675 = vunpack.c.l.b16 %v639
        %v676 = vpack.c.b16 %v661, %v660
        %v677 = vpack.c.b16 %v663, %v662
        %v678 = vpack.c.b16 %v665, %v664
        %v679 = vpack.c.b16 %v667, %v666
        %v680 = vpack.c.b16 %v669, %v668
        %v681 = vpack.c.b16 %v671, %v670
        %v682 = vpack.c.b16 %v673, %v672
        %v683 = vpack.c.b16 %v675, %v674
        %692 = vmatprep.subr.bf16.mxu0 0
        %693 = vmatpush1.bf16.msra.mxu0 %v676
        %694 = vmatprep.subr.bf16.mxu0 0
        %695 = vmatpush1.bf16.msra.mxu0 %v677
        %696 = vmatprep.subr.bf16.mxu0 0
        %697 = vmatpush1.bf16.msra.mxu0 %v678
        %698 = vmatprep.subr.bf16.mxu0 0
        %699 = vmatpush1.bf16.msra.mxu0 %v679
        %700 = vmatprep.subr.bf16.mxu0 0
        %701 = vmatpush1.bf16.msra.mxu0 %v680
        %702 = vmatprep.subr.bf16.mxu0 0
        %703 = vmatpush1.bf16.msra.mxu0 %v681
        %704 = vmatprep.subr.bf16.mxu0 0
        %705 = vmatpush1.bf16.msra.mxu0 %v682
        %706 = vmatprep.subr.bf16.mxu0 0
        %707 = vmatpush1.bf16.msra.mxu0 %v683
        %708 = vmatprep.subr.bf16.mxu0 0
        %709 = vmatpush1.bf16.msra.mxu0 0
        %710 = vmatprep.subr.bf16.mxu0 0
        %711 = vmatpush1.bf16.msra.mxu0 0
        %712 = vmatprep.subr.bf16.mxu0 0
        %713 = vmatpush1.bf16.msra.mxu0 0
        %714 = vmatprep.subr.bf16.mxu0 0
        %715 = vmatpush1.bf16.msra.mxu0 0
        %716 = vmatprep.subr.bf16.mxu0 0
        %717 = vmatpush1.bf16.msra.mxu0 0
        %718 = vmatprep.subr.bf16.mxu0 0
        %719 = vmatpush1.bf16.msra.mxu0 0
        %720 = vmatprep.subr.bf16.mxu0 0
        %721 = vmatpush1.bf16.msra.mxu0 0
        %722 = vmatprep.subr.bf16.mxu0 0
        %723 = vmatpush1.bf16.msra.mxu0 0
        %724 = vmatprep.mubr.bf16.mxu0 0
        %725 = vmatmul.mubr.bf16.gmra.mrb[0].mxu0 %v615
        %v726 = vpop.f32.mrb[0].mxu0
        %v727 = vadd.f32 %v643, %v726
        %v728 = vpop.f32.mrb[0].mxu0
        %v729 = vpop.f32.mrb[0].mxu0
        %v730 = vadd.f32 %v643, %v729
        %v731 = vpop.f32.mrb[0].mxu0
        %732 = vmatprep.mubr.bf16.mxu0 0
        %733 = vmatmul.mubr.bf16.gmra.mrb[0].mxu0 %v616
        %v734 = vpop.f32.mrb[0].mxu0
        %v735 = vadd.f32 %v643, %v734
        %v736 = vpop.f32.mrb[0].mxu0
        %v737 = vpop.f32.mrb[0].mxu0
        %v738 = vadd.f32 %v643, %v737
        %v739 = vpop.f32.mrb[0].mxu0
        %740 = vmatprep.mubr.bf16.mxu0 0
        %741 = vmatmul.mubr.bf16.gmra.mrb[0].mxu0 %v617
        %v742 = vpop.f32.mrb[0].mxu0
        %v743 = vadd.f32 %v643, %v742
        %v744 = vpop.f32.mrb[0].mxu0
        %v745 = vpop.f32.mrb[0].mxu0
        %v746 = vadd.f32 %v643, %v745
        %v747 = vpop.f32.mrb[0].mxu0
        %748 = vmatprep.mubr.bf16.mxu0 0
        %749 = vmatmul.mubr.bf16.gmra.mrb[0].mxu0 %v618
        %v750 = vpop.f32.mrb[0].mxu0
        %v751 = vadd.f32 %v643, %v750
        %v752 = vpop.f32.mrb[0].mxu0
        %v753 = vpop.f32.mrb[0].mxu0
        %v754 = vadd.f32 %v643, %v753
        %v755 = vpop.f32.mrb[0].mxu0
        %756 = vmatprep.mubr.bf16.mxu0 0
        %757 = vmatmul.mubr.bf16.gmra.mrb[0].mxu0 %v619
        %v758 = vpop.f32.mrb[0].mxu0
        %v759 = vadd.f32 %v643, %v758
        %v760 = vpop.f32.mrb[0].mxu0
        %v761 = vpop.f32.mrb[0].mxu0
        %v762 = vadd.f32 %v643, %v761
        %v763 = vpop.f32.mrb[0].mxu0
        %764 = vmatprep.mubr.bf16.mxu0 0
        %765 = vmatmul.mubr.bf16.gmra.mrb[0].mxu0 %v620
        %v766 = vpop.f32.mrb[0].mxu0
        %v767 = vadd.f32 %v643, %v766
        %v768 = vpop.f32.mrb[0].mxu0
        %v769 = vpop.f32.mrb[0].mxu0
        %v770 = vadd.f32 %v643, %v769
        %v771 = vpop.f32.mrb[0].mxu0
        %772 = vmatprep.mubr.bf16.mxu0 0
        %773 = vmatmul.mubr.bf16.gmra.mrb[0].mxu0 %v621
        %v774 = vpop.f32.mrb[0].mxu0
        %v775 = vadd.f32 %v643, %v774
        %v776 = vpop.f32.mrb[0].mxu0
        %v777 = vpop.f32.mrb[0].mxu0
        %v778 = vadd.f32 %v643, %v777
        %v779 = vpop.f32.mrb[0].mxu0
        %780 = vmatprep.mubr.bf16.mxu0 0
        %781 = vmatmul.mubr.bf16.gmra.mrb[0].mxu0 %v622
        %v782 = vpop.f32.mrb[0].mxu0
        %v783 = vadd.f32 %v643, %v782
        %v784 = vpop.f32.mrb[0].mxu0
        %v785 = vpop.f32.mrb[0].mxu0
        %v786 = vadd.f32 %v643, %v785
        %v787 = vpop.f32.mrb[0].mxu0
        %788 = vdwg.mxu0
        %v789 = vmax.f32 %v727, 0.0
        %v790 = vmax.f32 %v730, 0.0
        %v791 = vmax.f32 %v735, 0.0
        %v792 = vmax.f32 %v738, 0.0
        %v793 = vmax.f32 %v743, 0.0
        %v794 = vmax.f32 %v746, 0.0
        %v795 = vmax.f32 %v751, 0.0
        %v796 = vmax.f32 %v754, 0.0
        %v797 = vmax.f32 %v759, 0.0
        %v798 = vmax.f32 %v762, 0.0
        %v799 = vmax.f32 %v767, 0.0
        %v800 = vmax.f32 %v770, 0.0
        %v801 = vmax.f32 %v775, 0.0
        %v802 = vmax.f32 %v778, 0.0
        %v803 = vmax.f32 %v783, 0.0
        %v804 = vmax.f32 %v786, 0.0
        %v805 = vpack.c.bf16 %v790, %v789
        %v806 = vpack.c.bf16 %v792, %v791
        %v807 = vpack.c.bf16 %v794, %v793
        %v808 = vpack.c.bf16 %v796, %v795
        %v809 = vpack.c.bf16 %v798, %v797
        %v810 = vpack.c.bf16 %v800, %v799
        %v811 = vpack.c.bf16 %v802, %v801
        %v812 = vpack.c.bf16 %v804, %v803
        %s813 = scalar_lea.vmem [#allocation5], 192
        %v814 = vld [vmem:[%s813] sm:$0xf]
        %v815 = vld [vmem:[%s813 + $0x4] sm:$0xf]
        %v816 = vld [vmem:[%s813 + $0x8] sm:$0xf]
        %v817 = vld [vmem:[%s813 + $0xc] sm:$0xf]
        %v818 = vld [vmem:[%s813 + $0x10] sm:$0xf]
        %v819 = vld [vmem:[%s813 + $0x14] sm:$0xf]
        %v820 = vld [vmem:[%s813 + $0x18] sm:$0xf]
        %v821 = vld [vmem:[%s813 + $0x1c] sm:$0xf]
        %v822 = vld [vmem:[%s813 + $0x20] sm:$0xf]
        %v823 = vld [vmem:[%s813 + $0x24] sm:$0xf]
        %v824 = vld [vmem:[%s813 + $0x28] sm:$0xf]
        %v825 = vld [vmem:[%s813 + $0x2c] sm:$0xf]
        %v826 = vld [vmem:[%s813 + $0x30] sm:$0xf]
        %v827 = vld [vmem:[%s813 + $0x34] sm:$0xf]
        %v828 = vld [vmem:[%s813 + $0x38] sm:$0xf]
        %v829 = vld [vmem:[%s813 + $0x3c] sm:$0xf]
        %v830 = vlaneseq
        %v831 = vshrl.u32 %v830, 7
        %v832 = vsub.s32 3, %v831
        %v833 = vrot.slane %v235, %v832
        %v850 = vunpack.c.l.b16 %v814
        %v851 = vunpack.c.l.b16 %v815
        %v852 = vunpack.c.l.b16 %v816
        %v853 = vunpack.c.l.b16 %v817
        %v854 = vunpack.c.l.b16 %v818
        %v855 = vunpack.c.l.b16 %v819
        %v856 = vunpack.c.l.b16 %v820
        %v857 = vunpack.c.l.b16 %v821
        %v858 = vunpack.c.l.b16 %v822
        %v859 = vunpack.c.l.b16 %v823
        %v860 = vunpack.c.l.b16 %v824
        %v861 = vunpack.c.l.b16 %v825
        %v862 = vunpack.c.l.b16 %v826
        %v863 = vunpack.c.l.b16 %v827
        %v864 = vunpack.c.l.b16 %v828
        %v865 = vunpack.c.l.b16 %v829
        %v866 = vpack.c.b16 %v851, %v850
        %v867 = vpack.c.b16 %v853, %v852
        %v868 = vpack.c.b16 %v855, %v854
        %v869 = vpack.c.b16 %v857, %v856
        %v870 = vpack.c.b16 %v859, %v858
        %v871 = vpack.c.b16 %v861, %v860
        %v872 = vpack.c.b16 %v863, %v862
        %v873 = vpack.c.b16 %v865, %v864
        %882 = vmatprep.subr.bf16.mxu0 0
        %883 = vmatpush1.bf16.msra.mxu0 %v866
        %884 = vmatprep.subr.bf16.mxu0 0
        %885 = vmatpush1.bf16.msra.mxu0 %v867
        %886 = vmatprep.subr.bf16.mxu0 0
        %887 = vmatpush1.bf16.msra.mxu0 %v868
        %888 = vmatprep.subr.bf16.mxu0 0
        %889 = vmatpush1.bf16.msra.mxu0 %v869
        %890 = vmatprep.subr.bf16.mxu0 0
        %891 = vmatpush1.bf16.msra.mxu0 %v870
        %892 = vmatprep.subr.bf16.mxu0 0
        %893 = vmatpush1.bf16.msra.mxu0 %v871
        %894 = vmatprep.subr.bf16.mxu0 0
        %895 = vmatpush1.bf16.msra.mxu0 %v872
        %896 = vmatprep.subr.bf16.mxu0 0
        %897 = vmatpush1.bf16.msra.mxu0 %v873
        %898 = vmatprep.subr.bf16.mxu0 0
        %899 = vmatpush1.bf16.msra.mxu0 0
        %900 = vmatprep.subr.bf16.mxu0 0
        %901 = vmatpush1.bf16.msra.mxu0 0
        %902 = vmatprep.subr.bf16.mxu0 0
        %903 = vmatpush1.bf16.msra.mxu0 0
        %904 = vmatprep.subr.bf16.mxu0 0
        %905 = vmatpush1.bf16.msra.mxu0 0
        %906 = vmatprep.subr.bf16.mxu0 0
        %907 = vmatpush1.bf16.msra.mxu0 0
        %908 = vmatprep.subr.bf16.mxu0 0
        %909 = vmatpush1.bf16.msra.mxu0 0
        %910 = vmatprep.subr.bf16.mxu0 0
        %911 = vmatpush1.bf16.msra.mxu0 0
        %912 = vmatprep.subr.bf16.mxu0 0
        %913 = vmatpush1.bf16.msra.mxu0 0
        %914 = vmatprep.mubr.bf16.mxu0 0
        %915 = vmatmul.mubr.bf16.gmra.mrb[0].mxu0 %v805
        %v916 = vpop.f32.mrb[0].mxu0
        %v917 = vadd.f32 %v833, %v916
        %v918 = vpop.f32.mrb[0].mxu0
        %v919 = vpop.f32.mrb[0].mxu0
        %v920 = vadd.f32 %v833, %v919
        %v921 = vpop.f32.mrb[0].mxu0
        %922 = vmatprep.mubr.bf16.mxu0 0
        %923 = vmatmul.mubr.bf16.gmra.mrb[0].mxu0 %v806
        %v924 = vpop.f32.mrb[0].mxu0
        %v925 = vadd.f32 %v833, %v924
        %v926 = vpop.f32.mrb[0].mxu0
        %v927 = vpop.f32.mrb[0].mxu0
        %v928 = vadd.f32 %v833, %v927
        %v929 = vpop.f32.mrb[0].mxu0
        %930 = vmatprep.mubr.bf16.mxu0 0
        %931 = vmatmul.mubr.bf16.gmra.mrb[0].mxu0 %v807
        %v932 = vpop.f32.mrb[0].mxu0
        %v933 = vadd.f32 %v833, %v932
        %v934 = vpop.f32.mrb[0].mxu0
        %v935 = vpop.f32.mrb[0].mxu0
        %v936 = vadd.f32 %v833, %v935
        %v937 = vpop.f32.mrb[0].mxu0
        %938 = vmatprep.mubr.bf16.mxu0 0
        %939 = vmatmul.mubr.bf16.gmra.mrb[0].mxu0 %v808
        %v940 = vpop.f32.mrb[0].mxu0
        %v941 = vadd.f32 %v833, %v940
        %v942 = vpop.f32.mrb[0].mxu0
        %v943 = vpop.f32.mrb[0].mxu0
        %v944 = vadd.f32 %v833, %v943
        %v945 = vpop.f32.mrb[0].mxu0
        %946 = vmatprep.mubr.bf16.mxu0 0
        %947 = vmatmul.mubr.bf16.gmra.mrb[0].mxu0 %v809
        %v948 = vpop.f32.mrb[0].mxu0
        %v949 = vadd.f32 %v833, %v948
        %v950 = vpop.f32.mrb[0].mxu0
        %v951 = vpop.f32.mrb[0].mxu0
        %v952 = vadd.f32 %v833, %v951
        %v953 = vpop.f32.mrb[0].mxu0
        %954 = vmatprep.mubr.bf16.mxu0 0
        %955 = vmatmul.mubr.bf16.gmra.mrb[0].mxu0 %v810
        %v956 = vpop.f32.mrb[0].mxu0
        %v957 = vadd.f32 %v833, %v956
        %v958 = vpop.f32.mrb[0].mxu0
        %v959 = vpop.f32.mrb[0].mxu0
        %v960 = vadd.f32 %v833, %v959
        %v961 = vpop.f32.mrb[0].mxu0
        %962 = vmatprep.mubr.bf16.mxu0 0
        %963 = vmatmul.mubr.bf16.gmra.mrb[0].mxu0 %v811
        %v964 = vpop.f32.mrb[0].mxu0
        %v965 = vadd.f32 %v833, %v964
        %v966 = vpop.f32.mrb[0].mxu0
        %v967 = vpop.f32.mrb[0].mxu0
        %v968 = vadd.f32 %v833, %v967
        %v969 = vpop.f32.mrb[0].mxu0
        %970 = vmatprep.mubr.bf16.mxu0 0
        %971 = vmatmul.mubr.bf16.gmra.mrb[0].mxu0 %v812
        %v972 = vpop.f32.mrb[0].mxu0
        %v973 = vadd.f32 %v833, %v972
        %v974 = vpop.f32.mrb[0].mxu0
        %v975 = vpop.f32.mrb[0].mxu0
        %v976 = vadd.f32 %v833, %v975
        %v977 = vpop.f32.mrb[0].mxu0
        %978 = vdwg.mxu0
        %v979 = vmax.f32 %v917, 0.0
        %v980 = vmax.f32 %v920, 0.0
        %v981 = vmax.f32 %v925, 0.0
        %v982 = vmax.f32 %v928, 0.0
        %v983 = vmax.f32 %v933, 0.0
        %v984 = vmax.f32 %v936, 0.0
        %v985 = vmax.f32 %v941, 0.0
        %v986 = vmax.f32 %v944, 0.0
        %v987 = vmax.f32 %v949, 0.0
        %v988 = vmax.f32 %v952, 0.0
        %v989 = vmax.f32 %v957, 0.0
        %v990 = vmax.f32 %v960, 0.0
        %v991 = vmax.f32 %v965, 0.0
        %v992 = vmax.f32 %v968, 0.0
        %v993 = vmax.f32 %v973, 0.0
        %v994 = vmax.f32 %v976, 0.0
        %v995 = vpack.c.bf16 %v980, %v979
        %v996 = vpack.c.bf16 %v982, %v981
        %v997 = vpack.c.bf16 %v984, %v983
        %v998 = vpack.c.bf16 %v986, %v985
        %v999 = vpack.c.bf16 %v988, %v987
        %v1000 = vpack.c.bf16 %v990, %v989
        %v1001 = vpack.c.bf16 %v992, %v991
        %v1002 = vpack.c.bf16 %v994, %v993
        %s1003 = scalar_lea.vmem [#allocation5], 256
        %v1004 = vld [vmem:[%s1003] sm:$0xf]
        %v1005 = vld [vmem:[%s1003 + $0x4] sm:$0xf]
        %v1006 = vld [vmem:[%s1003 + $0x8] sm:$0xf]
        %v1007 = vld [vmem:[%s1003 + $0xc] sm:$0xf]
        %v1008 = vld [vmem:[%s1003 + $0x10] sm:$0xf]
        %v1009 = vld [vmem:[%s1003 + $0x14] sm:$0xf]
        %v1010 = vld [vmem:[%s1003 + $0x18] sm:$0xf]
        %v1011 = vld [vmem:[%s1003 + $0x1c] sm:$0xf]
        %v1012 = vld [vmem:[%s1003 + $0x20] sm:$0xf]
        %v1013 = vld [vmem:[%s1003 + $0x24] sm:$0xf]
        %v1014 = vld [vmem:[%s1003 + $0x28] sm:$0xf]
        %v1015 = vld [vmem:[%s1003 + $0x2c] sm:$0xf]
        %v1016 = vld [vmem:[%s1003 + $0x30] sm:$0xf]
        %v1017 = vld [vmem:[%s1003 + $0x34] sm:$0xf]
        %v1018 = vld [vmem:[%s1003 + $0x38] sm:$0xf]
        %v1019 = vld [vmem:[%s1003 + $0x3c] sm:$0xf]
        %v1020 = vlaneseq
        %v1021 = vshrl.u32 %v1020, 7
        %v1022 = vsub.s32 4, %v1021
        %v1023 = vrot.slane %v235, %v1022
        %v1040 = vunpack.c.l.b16 %v1004
        %v1041 = vunpack.c.l.b16 %v1005
        %v1042 = vunpack.c.l.b16 %v1006
        %v1043 = vunpack.c.l.b16 %v1007
        %v1044 = vunpack.c.l.b16 %v1008
        %v1045 = vunpack.c.l.b16 %v1009
        %v1046 = vunpack.c.l.b16 %v1010
        %v1047 = vunpack.c.l.b16 %v1011
        %v1048 = vunpack.c.l.b16 %v1012
        %v1049 = vunpack.c.l.b16 %v1013
        %v1050 = vunpack.c.l.b16 %v1014
        %v1051 = vunpack.c.l.b16 %v1015
        %v1052 = vunpack.c.l.b16 %v1016
        %v1053 = vunpack.c.l.b16 %v1017
        %v1054 = vunpack.c.l.b16 %v1018
        %v1055 = vunpack.c.l.b16 %v1019
        %v1056 = vpack.c.b16 %v1041, %v1040
        %v1057 = vpack.c.b16 %v1043, %v1042
        %v1058 = vpack.c.b16 %v1045, %v1044
        %v1059 = vpack.c.b16 %v1047, %v1046
        %v1060 = vpack.c.b16 %v1049, %v1048
        %v1061 = vpack.c.b16 %v1051, %v1050
        %v1062 = vpack.c.b16 %v1053, %v1052
        %v1063 = vpack.c.b16 %v1055, %v1054
        %1072 = vmatprep.subr.bf16.mxu0 0
        %1073 = vmatpush1.bf16.msra.mxu0 %v1056
        %1074 = vmatprep.subr.bf16.mxu0 0
        %1075 = vmatpush1.bf16.msra.mxu0 %v1057
        %1076 = vmatprep.subr.bf16.mxu0 0
        %1077 = vmatpush1.bf16.msra.mxu0 %v1058
        %1078 = vmatprep.subr.bf16.mxu0 0
        %1079 = vmatpush1.bf16.msra.mxu0 %v1059
        %1080 = vmatprep.subr.bf16.mxu0 0
        %1081 = vmatpush1.bf16.msra.mxu0 %v1060
        %1082 = vmatprep.subr.bf16.mxu0 0
        %1083 = vmatpush1.bf16.msra.mxu0 %v1061
        %1084 = vmatprep.subr.bf16.mxu0 0
        %1085 = vmatpush1.bf16.msra.mxu0 %v1062
        %1086 = vmatprep.subr.bf16.mxu0 0
        %1087 = vmatpush1.bf16.msra.mxu0 %v1063
        %1088 = vmatprep.subr.bf16.mxu0 0
        %1089 = vmatpush1.bf16.msra.mxu0 0
        %1090 = vmatprep.subr.bf16.mxu0 0
        %1091 = vmatpush1.bf16.msra.mxu0 0
        %1092 = vmatprep.subr.bf16.mxu0 0
        %1093 = vmatpush1.bf16.msra.mxu0 0
        %1094 = vmatprep.subr.bf16.mxu0 0
        %1095 = vmatpush1.bf16.msra.mxu0 0
        %1096 = vmatprep.subr.bf16.mxu0 0
        %1097 = vmatpush1.bf16.msra.mxu0 0
        %1098 = vmatprep.subr.bf16.mxu0 0
        %1099 = vmatpush1.bf16.msra.mxu0 0
        %1100 = vmatprep.subr.bf16.mxu0 0
        %1101 = vmatpush1.bf16.msra.mxu0 0
        %1102 = vmatprep.subr.bf16.mxu0 0
        %1103 = vmatpush1.bf16.msra.mxu0 0
        %1104 = vmatprep.mubr.bf16.mxu0 0
        %1105 = vmatmul.mubr.bf16.gmra.mrb[0].mxu0 %v995
        %v1106 = vpop.f32.mrb[0].mxu0
        %v1107 = vadd.f32 %v1023, %v1106
        %v1108 = vpop.f32.mrb[0].mxu0
        %v1109 = vpop.f32.mrb[0].mxu0
        %v1110 = vadd.f32 %v1023, %v1109
        %v1111 = vpop.f32.mrb[0].mxu0
        %1112 = vmatprep.mubr.bf16.mxu0 0
        %1113 = vmatmul.mubr.bf16.gmra.mrb[0].mxu0 %v996
        %v1114 = vpop.f32.mrb[0].mxu0
        %v1115 = vadd.f32 %v1023, %v1114
        %v1116 = vpop.f32.mrb[0].mxu0
        %v1117 = vpop.f32.mrb[0].mxu0
        %v1118 = vadd.f32 %v1023, %v1117
        %v1119 = vpop.f32.mrb[0].mxu0
        %1120 = vmatprep.mubr.bf16.mxu0 0
        %1121 = vmatmul.mubr.bf16.gmra.mrb[0].mxu0 %v997
        %v1122 = vpop.f32.mrb[0].mxu0
        %v1123 = vadd.f32 %v1023, %v1122
        %v1124 = vpop.f32.mrb[0].mxu0
        %v1125 = vpop.f32.mrb[0].mxu0
        %v1126 = vadd.f32 %v1023, %v1125
        %v1127 = vpop.f32.mrb[0].mxu0
        %1128 = vmatprep.mubr.bf16.mxu0 0
        %1129 = vmatmul.mubr.bf16.gmra.mrb[0].mxu0 %v998
        %v1130 = vpop.f32.mrb[0].mxu0
        %v1131 = vadd.f32 %v1023, %v1130
        %v1132 = vpop.f32.mrb[0].mxu0
        %v1133 = vpop.f32.mrb[0].mxu0
        %v1134 = vadd.f32 %v1023, %v1133
        %v1135 = vpop.f32.mrb[0].mxu0
        %1136 = vmatprep.mubr.bf16.mxu0 0
        %1137 = vmatmul.mubr.bf16.gmra.mrb[0].mxu0 %v999
        %v1138 = vpop.f32.mrb[0].mxu0
        %v1139 = vadd.f32 %v1023, %v1138
        %v1140 = vpop.f32.mrb[0].mxu0
        %v1141 = vpop.f32.mrb[0].mxu0
        %v1142 = vadd.f32 %v1023, %v1141
        %v1143 = vpop.f32.mrb[0].mxu0
        %1144 = vmatprep.mubr.bf16.mxu0 0
        %1145 = vmatmul.mubr.bf16.gmra.mrb[0].mxu0 %v1000
        %v1146 = vpop.f32.mrb[0].mxu0
        %v1147 = vadd.f32 %v1023, %v1146
        %v1148 = vpop.f32.mrb[0].mxu0
        %v1149 = vpop.f32.mrb[0].mxu0
        %v1150 = vadd.f32 %v1023, %v1149
        %v1151 = vpop.f32.mrb[0].mxu0
        %1152 = vmatprep.mubr.bf16.mxu0 0
        %1153 = vmatmul.mubr.bf16.gmra.mrb[0].mxu0 %v1001
        %v1154 = vpop.f32.mrb[0].mxu0
        %v1155 = vadd.f32 %v1023, %v1154
        %v1156 = vpop.f32.mrb[0].mxu0
        %v1157 = vpop.f32.mrb[0].mxu0
        %v1158 = vadd.f32 %v1023, %v1157
        %v1159 = vpop.f32.mrb[0].mxu0
        %1160 = vmatprep.mubr.bf16.mxu0 0
        %1161 = vmatmul.mubr.bf16.gmra.mrb[0].mxu0 %v1002
        %v1162 = vpop.f32.mrb[0].mxu0
        %v1163 = vadd.f32 %v1023, %v1162
        %v1164 = vpop.f32.mrb[0].mxu0
        %v1165 = vpop.f32.mrb[0].mxu0
        %v1166 = vadd.f32 %v1023, %v1165
        %v1167 = vpop.f32.mrb[0].mxu0
        %1168 = vdwg.mxu0
        %v1169 = vmax.f32 %v1107, 0.0
        %v1170 = vmax.f32 %v1110, 0.0
        %v1171 = vmax.f32 %v1115, 0.0
        %v1172 = vmax.f32 %v1118, 0.0
        %v1173 = vmax.f32 %v1123, 0.0
        %v1174 = vmax.f32 %v1126, 0.0
        %v1175 = vmax.f32 %v1131, 0.0
        %v1176 = vmax.f32 %v1134, 0.0
        %v1177 = vmax.f32 %v1139, 0.0
        %v1178 = vmax.f32 %v1142, 0.0
        %v1179 = vmax.f32 %v1147, 0.0
        %v1180 = vmax.f32 %v1150, 0.0
        %v1181 = vmax.f32 %v1155, 0.0
        %v1182 = vmax.f32 %v1158, 0.0
        %v1183 = vmax.f32 %v1163, 0.0
        %v1184 = vmax.f32 %v1166, 0.0
        %v1185 = vpack.c.bf16 %v1170, %v1169
        %v1186 = vpack.c.bf16 %v1172, %v1171
        %v1187 = vpack.c.bf16 %v1174, %v1173
        %v1188 = vpack.c.bf16 %v1176, %v1175
        %v1189 = vpack.c.bf16 %v1178, %v1177
        %v1190 = vpack.c.bf16 %v1180, %v1179
        %v1191 = vpack.c.bf16 %v1182, %v1181
        %v1192 = vpack.c.bf16 %v1184, %v1183
        %s1193 = scalar_lea.vmem [#allocation5], 320
        %v1194 = vld [vmem:[%s1193] sm:$0xf]
        %v1195 = vld [vmem:[%s1193 + $0x4] sm:$0xf]
        %v1196 = vld [vmem:[%s1193 + $0x8] sm:$0xf]
        %v1197 = vld [vmem:[%s1193 + $0xc] sm:$0xf]
        %v1198 = vld [vmem:[%s1193 + $0x10] sm:$0xf]
        %v1199 = vld [vmem:[%s1193 + $0x14] sm:$0xf]
        %v1200 = vld [vmem:[%s1193 + $0x18] sm:$0xf]
        %v1201 = vld [vmem:[%s1193 + $0x1c] sm:$0xf]
        %v1202 = vld [vmem:[%s1193 + $0x20] sm:$0xf]
        %v1203 = vld [vmem:[%s1193 + $0x24] sm:$0xf]
        %v1204 = vld [vmem:[%s1193 + $0x28] sm:$0xf]
        %v1205 = vld [vmem:[%s1193 + $0x2c] sm:$0xf]
        %v1206 = vld [vmem:[%s1193 + $0x30] sm:$0xf]
        %v1207 = vld [vmem:[%s1193 + $0x34] sm:$0xf]
        %v1208 = vld [vmem:[%s1193 + $0x38] sm:$0xf]
        %v1209 = vld [vmem:[%s1193 + $0x3c] sm:$0xf]
        %v1210 = vlaneseq
        %v1211 = vshrl.u32 %v1210, 7
        %v1212 = vsub.s32 5, %v1211
        %v1213 = vrot.slane %v235, %v1212
        %v1230 = vunpack.c.l.b16 %v1194
        %v1231 = vunpack.c.l.b16 %v1195
        %v1232 = vunpack.c.l.b16 %v1196
        %v1233 = vunpack.c.l.b16 %v1197
        %v1234 = vunpack.c.l.b16 %v1198
        %v1235 = vunpack.c.l.b16 %v1199
        %v1236 = vunpack.c.l.b16 %v1200
        %v1237 = vunpack.c.l.b16 %v1201
        %v1238 = vunpack.c.l.b16 %v1202
        %v1239 = vunpack.c.l.b16 %v1203
        %v1240 = vunpack.c.l.b16 %v1204
        %v1241 = vunpack.c.l.b16 %v1205
        %v1242 = vunpack.c.l.b16 %v1206
        %v1243 = vunpack.c.l.b16 %v1207
        %v1244 = vunpack.c.l.b16 %v1208
        %v1245 = vunpack.c.l.b16 %v1209
        %v1246 = vpack.c.b16 %v1231, %v1230
        %v1247 = vpack.c.b16 %v1233, %v1232
        %v1248 = vpack.c.b16 %v1235, %v1234
        %v1249 = vpack.c.b16 %v1237, %v1236
        %v1250 = vpack.c.b16 %v1239, %v1238
        %v1251 = vpack.c.b16 %v1241, %v1240
        %v1252 = vpack.c.b16 %v1243, %v1242
        %v1253 = vpack.c.b16 %v1245, %v1244
        %1262 = vmatprep.subr.bf16.mxu0 0
        %1263 = vmatpush1.bf16.msra.mxu0 %v1246
        %1264 = vmatprep.subr.bf16.mxu0 0
        %1265 = vmatpush1.bf16.msra.mxu0 %v1247
        %1266 = vmatprep.subr.bf16.mxu0 0
        %1267 = vmatpush1.bf16.msra.mxu0 %v1248
        %1268 = vmatprep.subr.bf16.mxu0 0
        %1269 = vmatpush1.bf16.msra.mxu0 %v1249
        %1270 = vmatprep.subr.bf16.mxu0 0
        %1271 = vmatpush1.bf16.msra.mxu0 %v1250
        %1272 = vmatprep.subr.bf16.mxu0 0
        %1273 = vmatpush1.bf16.msra.mxu0 %v1251
        %1274 = vmatprep.subr.bf16.mxu0 0
        %1275 = vmatpush1.bf16.msra.mxu0 %v1252
        %1276 = vmatprep.subr.bf16.mxu0 0
        %1277 = vmatpush1.bf16.msra.mxu0 %v1253
        %1278 = vmatprep.subr.bf16.mxu0 0
        %1279 = vmatpush1.bf16.msra.mxu0 0
        %1280 = vmatprep.subr.bf16.mxu0 0
        %1281 = vmatpush1.bf16.msra.mxu0 0
        %1282 = vmatprep.subr.bf16.mxu0 0
        %1283 = vmatpush1.bf16.msra.mxu0 0
        %1284 = vmatprep.subr.bf16.mxu0 0
        %1285 = vmatpush1.bf16.msra.mxu0 0
        %1286 = vmatprep.subr.bf16.mxu0 0
        %1287 = vmatpush1.bf16.msra.mxu0 0
        %1288 = vmatprep.subr.bf16.mxu0 0
        %1289 = vmatpush1.bf16.msra.mxu0 0
        %1290 = vmatprep.subr.bf16.mxu0 0
        %1291 = vmatpush1.bf16.msra.mxu0 0
        %1292 = vmatprep.subr.bf16.mxu0 0
        %1293 = vmatpush1.bf16.msra.mxu0 0
        %1294 = vmatprep.mubr.bf16.mxu0 0
        %1295 = vmatmul.mubr.bf16.gmra.mrb[0].mxu0 %v1185
        %v1296 = vpop.f32.mrb[0].mxu0
        %v1297 = vadd.f32 %v1213, %v1296
        %v1298 = vpop.f32.mrb[0].mxu0
        %v1299 = vpop.f32.mrb[0].mxu0
        %v1300 = vadd.f32 %v1213, %v1299
        %v1301 = vpop.f32.mrb[0].mxu0
        %1302 = vmatprep.mubr.bf16.mxu0 0
        %1303 = vmatmul.mubr.bf16.gmra.mrb[0].mxu0 %v1186
        %v1304 = vpop.f32.mrb[0].mxu0
        %v1305 = vadd.f32 %v1213, %v1304
        %v1306 = vpop.f32.mrb[0].mxu0
        %v1307 = vpop.f32.mrb[0].mxu0
        %v1308 = vadd.f32 %v1213, %v1307
        %v1309 = vpop.f32.mrb[0].mxu0
        %1310 = vmatprep.mubr.bf16.mxu0 0
        %1311 = vmatmul.mubr.bf16.gmra.mrb[0].mxu0 %v1187
        %v1312 = vpop.f32.mrb[0].mxu0
        %v1313 = vadd.f32 %v1213, %v1312
        %v1314 = vpop.f32.mrb[0].mxu0
        %v1315 = vpop.f32.mrb[0].mxu0
        %v1316 = vadd.f32 %v1213, %v1315
        %v1317 = vpop.f32.mrb[0].mxu0
        %1318 = vmatprep.mubr.bf16.mxu0 0
        %1319 = vmatmul.mubr.bf16.gmra.mrb[0].mxu0 %v1188
        %v1320 = vpop.f32.mrb[0].mxu0
        %v1321 = vadd.f32 %v1213, %v1320
        %v1322 = vpop.f32.mrb[0].mxu0
        %v1323 = vpop.f32.mrb[0].mxu0
        %v1324 = vadd.f32 %v1213, %v1323
        %v1325 = vpop.f32.mrb[0].mxu0
        %1326 = vmatprep.mubr.bf16.mxu0 0
        %1327 = vmatmul.mubr.bf16.gmra.mrb[0].mxu0 %v1189
        %v1328 = vpop.f32.mrb[0].mxu0
        %v1329 = vadd.f32 %v1213, %v1328
        %v1330 = vpop.f32.mrb[0].mxu0
        %v1331 = vpop.f32.mrb[0].mxu0
        %v1332 = vadd.f32 %v1213, %v1331
        %v1333 = vpop.f32.mrb[0].mxu0
        %1334 = vmatprep.mubr.bf16.mxu0 0
        %1335 = vmatmul.mubr.bf16.gmra.mrb[0].mxu0 %v1190
        %v1336 = vpop.f32.mrb[0].mxu0
        %v1337 = vadd.f32 %v1213, %v1336
        %v1338 = vpop.f32.mrb[0].mxu0
        %v1339 = vpop.f32.mrb[0].mxu0
        %v1340 = vadd.f32 %v1213, %v1339
        %v1341 = vpop.f32.mrb[0].mxu0
        %1342 = vmatprep.mubr.bf16.mxu0 0
        %1343 = vmatmul.mubr.bf16.gmra.mrb[0].mxu0 %v1191
        %v1344 = vpop.f32.mrb[0].mxu0
        %v1345 = vadd.f32 %v1213, %v1344
        %v1346 = vpop.f32.mrb[0].mxu0
        %v1347 = vpop.f32.mrb[0].mxu0
        %v1348 = vadd.f32 %v1213, %v1347
        %v1349 = vpop.f32.mrb[0].mxu0
        %1350 = vmatprep.mubr.bf16.mxu0 0
        %1351 = vmatmul.mubr.bf16.gmra.mrb[0].mxu0 %v1192
        %v1352 = vpop.f32.mrb[0].mxu0
        %v1353 = vadd.f32 %v1213, %v1352
        %v1354 = vpop.f32.mrb[0].mxu0
        %v1355 = vpop.f32.mrb[0].mxu0
        %v1356 = vadd.f32 %v1213, %v1355
        %v1357 = vpop.f32.mrb[0].mxu0
        %1358 = vdwg.mxu0
        %v1359 = vlaneseq
        %v1360 = vand.u32 %v1359, 127
        %vm1361 = vcmp.lt.s32.totalorder %v1360, 2
        %v1362 = vsel %vm1361, %v1297, -1e+30
        %v1363 = vsel %vm1361, %v1300, -1e+30
        %v1364 = vsel %vm1361, %v1305, -1e+30
        %v1365 = vsel %vm1361, %v1308, -1e+30
        %v1366 = vsel %vm1361, %v1313, -1e+30
        %v1367 = vsel %vm1361, %v1316, -1e+30
        %v1368 = vsel %vm1361, %v1321, -1e+30
        %v1369 = vsel %vm1361, %v1324, -1e+30
        %v1370 = vsel %vm1361, %v1329, -1e+30
        %v1371 = vsel %vm1361, %v1332, -1e+30
        %v1372 = vsel %vm1361, %v1337, -1e+30
        %v1373 = vsel %vm1361, %v1340, -1e+30
        %v1374 = vsel %vm1361, %v1345, -1e+30
        %v1375 = vsel %vm1361, %v1348, -1e+30
        %v1376 = vsel %vm1361, %v1353, -1e+30
        %v1377 = vsel %vm1361, %v1356, -1e+30
        %1378 = vmax.xlane.f32.xlu0 %v1362
        %v1379 = vpop.xlane.xlu0 %1378
        %1380 = vmax.xlane.f32.xlu0 %v1363
        %v1381 = vpop.xlane.xlu0 %1380
        %1382 = vmax.xlane.f32.xlu0 %v1364
        %v1383 = vpop.xlane.xlu0 %1382
        %1384 = vmax.xlane.f32.xlu0 %v1365
        %v1385 = vpop.xlane.xlu0 %1384
        %1386 = vmax.xlane.f32.xlu0 %v1366
        %v1387 = vpop.xlane.xlu0 %1386
        %1388 = vmax.xlane.f32.xlu0 %v1367
        %v1389 = vpop.xlane.xlu0 %1388
        %1390 = vmax.xlane.f32.xlu0 %v1368
        %v1391 = vpop.xlane.xlu0 %1390
        %1392 = vmax.xlane.f32.xlu0 %v1369
        %v1393 = vpop.xlane.xlu0 %1392
        %1394 = vmax.xlane.f32.xlu0 %v1370
        %v1395 = vpop.xlane.xlu0 %1394
        %1396 = vmax.xlane.f32.xlu0 %v1371
        %v1397 = vpop.xlane.xlu0 %1396
        %1398 = vmax.xlane.f32.xlu0 %v1372
        %v1399 = vpop.xlane.xlu0 %1398
        %1400 = vmax.xlane.f32.xlu0 %v1373
        %v1401 = vpop.xlane.xlu0 %1400
        %1402 = vmax.xlane.f32.xlu0 %v1374
        %v1403 = vpop.xlane.xlu0 %1402
        %1404 = vmax.xlane.f32.xlu0 %v1375
        %v1405 = vpop.xlane.xlu0 %1404
        %1406 = vmax.xlane.f32.xlu0 %v1376
        %v1407 = vpop.xlane.xlu0 %1406
        %1408 = vmax.xlane.f32.xlu0 %v1377
        %v1409 = vpop.xlane.xlu0 %1408
        %v1410 = vsub.f32 %v1362, %v1379
        %v1411 = vsub.f32 %v1363, %v1381
        %v1412 = vsub.f32 %v1364, %v1383
        %v1413 = vsub.f32 %v1365, %v1385
        %v1414 = vsub.f32 %v1366, %v1387
        %v1415 = vsub.f32 %v1367, %v1389
        %v1416 = vsub.f32 %v1368, %v1391
        %v1417 = vsub.f32 %v1369, %v1393
        %v1418 = vsub.f32 %v1370, %v1395
        %v1419 = vsub.f32 %v1371, %v1397
        %v1420 = vsub.f32 %v1372, %v1399
        %v1421 = vsub.f32 %v1373, %v1401
        %v1422 = vsub.f32 %v1374, %v1403
        %v1423 = vsub.f32 %v1375, %v1405
        %v1424 = vsub.f32 %v1376, %v1407
        %v1425 = vsub.f32 %v1377, %v1409
        %v1426 = vmul.f32 %v1410, 1.442695
        %v1427 = vpow.pop %v1426
        %v1428 = vmul.f32 %v1411, 1.442695
        %v1429 = vpow.pop %v1428
        %v1430 = vmul.f32 %v1412, 1.442695
        %v1431 = vpow.pop %v1430
        %v1432 = vmul.f32 %v1413, 1.442695
        %v1433 = vpow.pop %v1432
        %v1434 = vmul.f32 %v1414, 1.442695
        %v1435 = vpow.pop %v1434
        %v1436 = vmul.f32 %v1415, 1.442695
        %v1437 = vpow.pop %v1436
        %v1438 = vmul.f32 %v1416, 1.442695
        %v1439 = vpow.pop %v1438
        %v1440 = vmul.f32 %v1417, 1.442695
        %v1441 = vpow.pop %v1440
        %v1442 = vmul.f32 %v1418, 1.442695
        %v1443 = vpow.pop %v1442
        %v1444 = vmul.f32 %v1419, 1.442695
        %v1445 = vpow.pop %v1444
        %v1446 = vmul.f32 %v1420, 1.442695
        %v1447 = vpow.pop %v1446
        %v1448 = vmul.f32 %v1421, 1.442695
        %v1449 = vpow.pop %v1448
        %v1450 = vmul.f32 %v1422, 1.442695
        %v1451 = vpow.pop %v1450
        %v1452 = vmul.f32 %v1423, 1.442695
        %v1453 = vpow.pop %v1452
        %v1454 = vmul.f32 %v1424, 1.442695
        %v1455 = vpow.pop %v1454
        %v1456 = vmul.f32 %v1425, 1.442695
        %v1457 = vpow.pop %v1456
        %1458 = vadd.xlane.f32.xlu0 %v1427
        %v1459 = vpop.xlane.xlu0 %1458
        %1460 = vadd.xlane.f32.xlu0 %v1429
        %v1461 = vpop.xlane.xlu0 %1460
        %1462 = vadd.xlane.f32.xlu0 %v1431
        %v1463 = vpop.xlane.xlu0 %1462
        %1464 = vadd.xlane.f32.xlu0 %v1433
        %v1465 = vpop.xlane.xlu0 %1464
        %1466 = vadd.xlane.f32.xlu0 %v1435
        %v1467 = vpop.xlane.xlu0 %1466
        %1468 = vadd.xlane.f32.xlu0 %v1437
        %v1469 = vpop.xlane.xlu0 %1468
        %1470 = vadd.xlane.f32.xlu0 %v1439
        %v1471 = vpop.xlane.xlu0 %1470
        %1472 = vadd.xlane.f32.xlu0 %v1441
        %v1473 = vpop.xlane.xlu0 %1472
        %1474 = vadd.xlane.f32.xlu0 %v1443
        %v1475 = vpop.xlane.xlu0 %1474
        %1476 = vadd.xlane.f32.xlu0 %v1445
        %v1477 = vpop.xlane.xlu0 %1476
        %1478 = vadd.xlane.f32.xlu0 %v1447
        %v1479 = vpop.xlane.xlu0 %1478
        %1480 = vadd.xlane.f32.xlu0 %v1449
        %v1481 = vpop.xlane.xlu0 %1480
        %1482 = vadd.xlane.f32.xlu0 %v1451
        %v1483 = vpop.xlane.xlu0 %1482
        %1484 = vadd.xlane.f32.xlu0 %v1453
        %v1485 = vpop.xlane.xlu0 %1484
        %1486 = vadd.xlane.f32.xlu0 %v1455
        %v1487 = vpop.xlane.xlu0 %1486
        %1488 = vadd.xlane.f32.xlu0 %v1457
        %v1489 = vpop.xlane.xlu0 %1488
        %v1490 = vlog2.pop %v1459
        %v1491 = vmul.f32 %v1490, 0.6931472
        %v1492 = vlog2.pop %v1461
        %v1493 = vmul.f32 %v1492, 0.6931472
        %v1494 = vlog2.pop %v1463
        %v1495 = vmul.f32 %v1494, 0.6931472
        %v1496 = vlog2.pop %v1465
        %v1497 = vmul.f32 %v1496, 0.6931472
        %v1498 = vlog2.pop %v1467
        %v1499 = vmul.f32 %v1498, 0.6931472
        %v1500 = vlog2.pop %v1469
        %v1501 = vmul.f32 %v1500, 0.6931472
        %v1502 = vlog2.pop %v1471
        %v1503 = vmul.f32 %v1502, 0.6931472
        %v1504 = vlog2.pop %v1473
        %v1505 = vmul.f32 %v1504, 0.6931472
        %v1506 = vlog2.pop %v1475
        %v1507 = vmul.f32 %v1506, 0.6931472
        %v1508 = vlog2.pop %v1477
        %v1509 = vmul.f32 %v1508, 0.6931472
        %v1510 = vlog2.pop %v1479
        %v1511 = vmul.f32 %v1510, 0.6931472
        %v1512 = vlog2.pop %v1481
        %v1513 = vmul.f32 %v1512, 0.6931472
        %v1514 = vlog2.pop %v1483
        %v1515 = vmul.f32 %v1514, 0.6931472
        %v1516 = vlog2.pop %v1485
        %v1517 = vmul.f32 %v1516, 0.6931472
        %v1518 = vlog2.pop %v1487
        %v1519 = vmul.f32 %v1518, 0.6931472
        %v1520 = vlog2.pop %v1489
        %v1521 = vmul.f32 %v1520, 0.6931472
        %v1522 = vsub.f32 %v1410, %v1491
        %v1523 = vsub.f32 %v1411, %v1493
        %v1524 = vsub.f32 %v1412, %v1495
        %v1525 = vsub.f32 %v1413, %v1497
        %v1526 = vsub.f32 %v1414, %v1499
        %v1527 = vsub.f32 %v1415, %v1501
        %v1528 = vsub.f32 %v1416, %v1503
        %v1529 = vsub.f32 %v1417, %v1505
        %v1530 = vsub.f32 %v1418, %v1507
        %v1531 = vsub.f32 %v1419, %v1509
        %v1532 = vsub.f32 %v1420, %v1511
        %v1533 = vsub.f32 %v1421, %v1513
        %v1534 = vsub.f32 %v1422, %v1515
        %v1535 = vsub.f32 %v1423, %v1517
        %v1536 = vsub.f32 %v1424, %v1519
        %v1537 = vsub.f32 %v1425, %v1521
        %1538 = vst [vmem:[%s215] sm:$0xff] %v1522
        %1539 = vst [vmem:[%s215 + $0x8] sm:$0xff] %v1523
        %1540 = vst [vmem:[%s215 + $0x10] sm:$0xff] %v1524
        %1541 = vst [vmem:[%s215 + $0x18] sm:$0xff] %v1525
        %1542 = vst [vmem:[%s215 + $0x20] sm:$0xff] %v1526
        %1543 = vst [vmem:[%s215 + $0x28] sm:$0xff] %v1527
        %1544 = vst [vmem:[%s215 + $0x30] sm:$0xff] %v1528
        %1545 = vst [vmem:[%s215 + $0x38] sm:$0xff] %v1529
        %1546 = vst [vmem:[%s215 + $0x40] sm:$0xff] %v1530
        %1547 = vst [vmem:[%s215 + $0x48] sm:$0xff] %v1531
        %1548 = vst [vmem:[%s215 + $0x50] sm:$0xff] %v1532
        %1549 = vst [vmem:[%s215 + $0x58] sm:$0xff] %v1533
        %1550 = vst [vmem:[%s215 + $0x60] sm:$0xff] %v1534
        %1551 = vst [vmem:[%s215 + $0x68] sm:$0xff] %v1535
        %1552 = vst [vmem:[%s215 + $0x70] sm:$0xff] %v1536
        %1553 = vst [vmem:[%s215 + $0x78] sm:$0xff] %v1537
        %s1554 = sand.u32 %s97, 1
        %s1555 = scalar_lea.sflag [#allocation4], %s1554
        %s1556 = sand.u32 %s97, 1
        %s1557 = smul.addr %s1556, 128
        %s1558 = scalar_lea.vmem [#allocation8], %s1557
        // Predicated region
        $region45: #{tpu_custom_call.1} parent=31 // pred_check
          %p1559 = pneg %p107
        $region46: #{tpu_custom_call.1} parent=31 // pred_check_branch
          %1561 = sbr.rel (%p1559) target = $region48
        $region47: #{tpu_custom_call.1} parent=31 // pred_region
          %s1562 = smul.u32 16, %s21
          %s1564 = ssub.s32 2048, 2048
          %1565 = vsyncadd %s1555, %s1564
          %s1566 = smul.addr %s1562, 128
          %s1567 = scalar_lea.hbm %s3, %s1566
          %s1568 = sshll.u32 %s1558, 4
          %s1569 = int_to_ptr.vmem [resolvable:$true] %s1568
          %1574 = dma.vmem_to_hbm [thread:$0]  %s1569, 2048, %s1567, %s1555, 128, 128, 8
        $region48: #{tpu_custom_call.1} parent=31 // pred_fallthru
          _
      $region32: #{tpu_custom_call.1} parent=5 // pred_fallthru
        _
      %p1575 = scmp.le.s32.totalorder 2, %s16
      // Predicated region
      $region49: #{tpu_custom_call.1} parent=5 // pred_check
        %p1576 = pneg %p1575
      $region50: #{tpu_custom_call.1} parent=5 // pred_check_branch
        %1578 = sbr.rel (%p1576) target = $region52
      $region51: #{tpu_custom_call.1} parent=5 // pred_region
        %s1579 = ssub.s32 %s16, 2
        // Predicated region
        $region53: #{tpu_custom_call.1} parent=51 // pred_check
          %p1580 = pneg %p113
        $region54: #{tpu_custom_call.1} parent=51 // pred_check_branch
          %1582 = sbr.rel (%p1580) target = $region56
        $region55: #{tpu_custom_call.1} parent=51 // pred_region
          %s1583 = sand.u32 %s98, 1
          %s1584 = scalar_lea.sflag [#allocation4], %s1583
          %s1585 = sand.u32 %s98, 1
          %s1586 = smul.addr %s1585, 128
          %s1587 = scalar_lea.vmem [#allocation8], %s1586
          %1588 = dma.done %s1584, 2048
        $region56: #{tpu_custom_call.1} parent=51 // pred_fallthru
          _
      $region52: #{tpu_custom_call.1} parent=5 // pred_fallthru
        _
    $region6: #{tpu_custom_call.1} parent=1 // loop_footer
      %s20 = sadd.s32 1, %s16
    $region7: #{tpu_custom_call.1} parent=1 // loop_footer_branch
      %15 = sbr.rel target = $region3
    $region8: #{tpu_custom_call.1} parent=1 // loop_exit
      _
    %1589 = vsyncpa [#allocation3], 1
    %s1590 = scalar_lea.sflag [#allocation3], 1
    %1591 = vsyncpa %s1590, 1
    %1592 = vsyncpa [#allocation6], 1
    %1593 = vsyncpa [#allocation4], 1
    %s1594 = scalar_lea.sflag [#allocation4], 1
    %1595 = vsyncpa %s1594, 1

</llo_original>
